<compile_context>
chip_gen: v6e
topology: v6e:2x2x1
jax: 0.10.0
libtpu: 0.0.40
codegen_flags: <defaults>
</compile_context>

<pallas_src>
import jax
import jax.numpy as jnp
from jax.experimental import pallas as pl
from jax.experimental.pallas import tpu as pltpu


def _lstm_kernel(x_ref, wih_ref, whh_ref, b_ref, wlin_ref, blin_ref,
                 out_ref, gx_sc):
    # x_ref is time-major: (T, B, I).
    T, B, I = x_ref.shape
    H = whh_ref.shape[0]

    # ---- Hoisted input projection (+ fused bias): one big MXU matmul for
    # all timesteps.  (T,B,I)->(T*B,I) and (T*B,4H)->(T,B,4H) only merge /
    # split leading dims (minor dim untouched), so they are layout-preserving.
    x_flat = x_ref[...].reshape(T * B, I)
    gx = (jnp.dot(x_flat, wih_ref[...], preferred_element_type=jnp.float32)
          + b_ref[...])
    gx_sc[...] = gx.reshape(T, B, 4 * H)

    def _sigmoid(z):
        # sigmoid(z) = 0.5*tanh(z/2) + 0.5 : single EUP push per element,
        # the scale/shift co-issues on idle VALU slots.
        return 0.5 * jnp.tanh(0.5 * z) + 0.5

    whh = whh_ref[...]  # hoist the weight load out of the unrolled loop

    # ---- Sequential recurrence: only the h @ W_hh matmul + gate math per step.
    def step(t, carry):
        h, c = carry
        gates = gx_sc[t] + jnp.dot(h, whh, preferred_element_type=jnp.float32)
        i_g = _sigmoid(gates[:, 0 * H:1 * H])
        f_g = _sigmoid(gates[:, 1 * H:2 * H])
        g_g = jnp.tanh(gates[:, 2 * H:3 * H])
        o_g = _sigmoid(gates[:, 3 * H:4 * H])
        c = f_g * c + i_g * g_g
        h = o_g * jnp.tanh(c)
        return h, c

    h0 = jnp.zeros((B, H), jnp.float32)
    c0 = jnp.zeros((B, H), jnp.float32)
    h_T, _ = jax.lax.fori_loop(0, T, step, (h0, c0), unroll=True)

    # ---- Final Linear on the last hidden state (lane-padded, dense store).
    out_ref[...] = (jnp.dot(h_T, wlin_ref[...],
                            preferred_element_type=jnp.float32)
                    + blin_ref[...])


def lstm_model_forward(x_btI, params):
    """x_btI: (B, T, I) float32, like the PyTorch module (batch_first=True).
    Returns predictions of shape (B, output_size)."""
    wih_t, whh_t, b, wlin_t, blin = params
    B, T, I = x_btI.shape
    H = whh_t.shape[0]
    O = wlin_t.shape[1]
    O_pad = ((O + 127) // 128) * 128

    # Time-major layout so each loop step reads a contiguous (B, 4H) slab of
    # the precomputed projection.  Tiny one-off XLA op at these shapes; for
    # long sequences fold it into an XLA-side x @ W_ih precompute instead.
    x_tbI = jnp.transpose(x_btI, (1, 0, 2))

    # Lane-pad the Linear weights so the output store is lane-dense (128 wide).
    wlin_p = jnp.pad(wlin_t, ((0, 0), (0, O_pad - O)))
    blin_p = jnp.pad(blin, ((0, 0), (0, O_pad - O)))

    grid_spec = pltpu.PrefetchScalarGridSpec(
        num_scalar_prefetch=0,
        grid=(1,),
        in_specs=[
            pl.BlockSpec((T, B, I), lambda i: (0, 0, 0)),      # x (time-major)
            pl.BlockSpec((I, 4 * H), lambda i: (0, 0)),        # W_ih^T
            pl.BlockSpec((H, 4 * H), lambda i: (0, 0)),        # W_hh^T
            pl.BlockSpec((1, 4 * H), lambda i: (0, 0)),        # b_ih + b_hh
            pl.BlockSpec((H, O_pad), lambda i: (0, 0)),        # W_lin^T (padded)
            pl.BlockSpec((1, O_pad), lambda i: (0, 0)),        # b_lin (padded)
        ],
        out_specs=pl.BlockSpec((B, O_pad), lambda i: (0, 0)),
        scratch_shapes=[
            pltpu.VMEM((T, B, 4 * H), jnp.float32),            # hoisted x@W_ih
        ],
    )

    out_padded = pl.pallas_call(
        _lstm_kernel,
        out_shape=jax.ShapeDtypeStruct((B, O_pad), jnp.float32),
        grid_spec=grid_spec,
        compiler_params=pltpu.CompilerParams(
            dimension_semantics=("arbitrary",)),               # sequential recurrence
    )(x_tbI, wih_t, whh_t, b, wlin_p, blin_p)

    return out_padded[:, :O]


def init_params(key, input_size, hidden_size, output_size):
    """Deterministic init mimicking PyTorch's U(-1/sqrt(H), 1/sqrt(H))."""
    ks = jax.random.split(key, 6)
    bound = 1.0 / jnp.sqrt(hidden_size)
    w_ih = jax.random.uniform(ks[0], (4 * hidden_size, input_size),
                              minval=-bound, maxval=bound, dtype=jnp.float32)
    w_hh = jax.random.uniform(ks[1], (4 * hidden_size, hidden_size),
                              minval=-bound, maxval=bound, dtype=jnp.float32)
    b_ih = jax.random.uniform(ks[2], (4 * hidden_size,),
                              minval=-bound, maxval=bound, dtype=jnp.float32)
    b_hh = jax.random.uniform(ks[3], (4 * hidden_size,),
                              minval=-bound, maxval=bound, dtype=jnp.float32)
    w_lin = jax.random.uniform(ks[4], (output_size, hidden_size),
                               minval=-bound, maxval=bound, dtype=jnp.float32)
    b_lin = jax.random.uniform(ks[5], (output_size,),
                               minval=-bound, maxval=bound, dtype=jnp.float32)
    # Pre-transpose / fuse biases for the kernel (PyTorch gate order i,f,g,o).
    return (w_ih.T, w_hh.T, (b_ih + b_hh)[None, :], w_lin.T, b_lin[None, :])


def reference_forward(x_btI, params):
    """Pure-JAX reference (lax.scan) of the PyTorch LSTMModel forward."""
    wih_t, whh_t, b, wlin_t, blin = params
    B = x_btI.shape[0]
    H = whh_t.shape[0]

    def step(carry, x_t):
        h, c = carry
        gates = x_t @ wih_t + h @ whh_t + b
        i_g = jax.nn.sigmoid(gates[:, 0 * H:1 * H])
        f_g = jax.nn.sigmoid(gates[:, 1 * H:2 * H])
        g_g = jnp.tanh(gates[:, 2 * H:3 * H])
        o_g = jax.nn.sigmoid(gates[:, 3 * H:4 * H])
        c = f_g * c + i_g * g_g
        h = o_g * jnp.tanh(c)
        return (h, c), None

    h0 = jnp.zeros((B, H), jnp.float32)
    c0 = jnp.zeros((B, H), jnp.float32)
    (h_T, _), _ = jax.lax.scan(step, (h0, c0), jnp.transpose(x_btI, (1, 0, 2)))
    return h_T @ wlin_t + blin


if __name__ == "__main__":
    # Small shapes consistent with the module: (batch, seq, input_size).
    B, T, I, H, O = 8, 8, 4, 32, 1

    key = jax.random.PRNGKey(0)
    k_x, k_p = jax.random.split(key)
    x = jax.random.normal(k_x, (B, T, I), dtype=jnp.float32)
    params = init_params(k_p, I, H, O)

    preds = lstm_model_forward(x, params)
    preds = jax.block_until_ready(preds)

    ref = reference_forward(x, params)
    assert preds.shape == (B, O)
    assert jnp.allclose(preds, ref, atol=1e-4, rtol=1e-4), "mismatch vs reference"

    print("KERNEL_OK")
</pallas_src>

<mosaic_0001>
module attributes {stable_mosaic.version = 11 : i64} {
  func.func @_lstm_kernel(%arg0: i32, %arg1: memref<8x8x4xf32, #tpu.memory_space<vmem>>, %arg2: memref<4x128xf32, #tpu.memory_space<vmem>>, %arg3: memref<32x128xf32, #tpu.memory_space<vmem>>, %arg4: memref<1x128xf32, #tpu.memory_space<vmem>>, %arg5: memref<32x128xf32, #tpu.memory_space<vmem>>, %arg6: memref<1x128xf32, #tpu.memory_space<vmem>>, %arg7: memref<8x128xf32, #tpu.memory_space<vmem>>, %arg8: memref<8x8x128xf32, #tpu.memory_space<vmem>>) attributes {dimension_semantics = [#tpu.dimension_semantics<arbitrary>], iteration_bounds = array<i64: 1>, scalar_prefetch = 0 : i64, scratch_operands = 1 : i64, tpu.core_type = #tpu.core_type<tc>, window_params = [{pipeline_mode = #tpu.pipeline_mode<synchronous>, transform_indices = @transform_0, window_bounds = array<i64: 8, 8, 4>}, {pipeline_mode = #tpu.pipeline_mode<synchronous>, transform_indices = @transform_1, window_bounds = array<i64: 4, 128>}, {pipeline_mode = #tpu.pipeline_mode<synchronous>, transform_indices = @transform_2, window_bounds = array<i64: 32, 128>}, {pipeline_mode = #tpu.pipeline_mode<synchronous>, transform_indices = @transform_3, window_bounds = array<i64: 1, 128>}, {pipeline_mode = #tpu.pipeline_mode<synchronous>, transform_indices = @transform_4, window_bounds = array<i64: 32, 128>}, {pipeline_mode = #tpu.pipeline_mode<synchronous>, transform_indices = @transform_5, window_bounds = array<i64: 1, 128>}, {pipeline_mode = #tpu.pipeline_mode<synchronous>, transform_indices = @transform_6, window_bounds = array<i64: 8, 128>}]} {
    %c0 = arith.constant 0 : index
    %c0_0 = arith.constant 0 : index
    %c0_1 = arith.constant 0 : index
    %0 = vector.load %arg1[%c0, %c0_0, %c0_1] : memref<8x8x4xf32, #tpu.memory_space<vmem>>, vector<8x8x4xf32>
    %1 = vector.shape_cast %0 : vector<8x8x4xf32> to vector<64x4xf32>
    %c0_2 = arith.constant 0 : index
    %c0_3 = arith.constant 0 : index
    %2 = vector.load %arg2[%c0_2, %c0_3] : memref<4x128xf32, #tpu.memory_space<vmem>>, vector<4x128xf32>
    %cst = arith.constant dense<0.000000e+00> : vector<64x128xf32>
    %3 = tpu.matmul %1, %2, %cst {dimension_numbers = #tpu.dot_dimension_numbers<[1], [0], [0], [1], [0, 0, 1, 1], [], []>} : vector<64x4xf32>, vector<4x128xf32>, vector<64x128xf32> -> vector<64x128xf32>
    %c0_4 = arith.constant 0 : index
    %c0_5 = arith.constant 0 : index
    %4 = vector.load %arg4[%c0_4, %c0_5] : memref<1x128xf32, #tpu.memory_space<vmem>>, vector<1x128xf32>
    %5 = vector.broadcast %4 : vector<1x128xf32> to vector<64x128xf32>
    %6 = arith.addf %3, %5 : vector<64x128xf32>
    %7 = vector.shape_cast %6 : vector<64x128xf32> to vector<8x8x128xf32>
    %c0_6 = arith.constant 0 : index
    %c0_7 = arith.constant 0 : index
    %c0_8 = arith.constant 0 : index
    %8 = vector.load %arg8[%c0_6, %c0_7, %c0_8] : memref<8x8x128xf32, #tpu.memory_space<vmem>>, vector<8x8x128xf32>
    tpu.vector_store %arg8[%c0_6, %c0_7, %c0_8], %7 {strides = array<i32>} : memref<8x8x128xf32, #tpu.memory_space<vmem>>, vector<8x8x128xf32>,
    %c0_9 = arith.constant 0 : index
    %c0_10 = arith.constant 0 : index
    %9 = vector.load %arg3[%c0_9, %c0_10] : memref<32x128xf32, #tpu.memory_space<vmem>>, vector<32x128xf32>
    %cst_11 = arith.constant 0.000000e+00 : f32
    %10 = vector.broadcast %cst_11 : f32 to vector<8x32xf32>
    %cst_12 = arith.constant 0.000000e+00 : f32
    %11 = vector.broadcast %cst_12 : f32 to vector<8x32xf32>
    %c0_i32 = arith.constant 0 : i32
    %12 = arith.index_cast %c0_i32 : i32 to index
    %c0_13 = arith.constant 0 : index
    %c0_14 = arith.constant 0 : index
    %13 = vector.load %arg8[%12, %c0_13, %c0_14] : memref<8x8x128xf32, #tpu.memory_space<vmem>>, vector<1x8x128xf32>
    %14 = vector.shape_cast %13 : vector<1x8x128xf32> to vector<8x128xf32>
    %cst_15 = arith.constant dense<0.000000e+00> : vector<8x128xf32>
    %15 = tpu.matmul %10, %9, %cst_15 {dimension_numbers = #tpu.dot_dimension_numbers<[1], [0], [0], [1], [0, 0, 1, 1], [], []>} : vector<8x32xf32>, vector<32x128xf32>, vector<8x128xf32> -> vector<8x128xf32>
    %16 = arith.addf %14, %15 : vector<8x128xf32>
    %17 = vector.extract_strided_slice %16 {offsets = [0, 0], sizes = [8, 32], strides = [1, 1]} : vector<8x128xf32> to vector<8x32xf32>
    %cst_16 = arith.constant 5.000000e-01 : f32
    %18 = vector.broadcast %cst_16 : f32 to vector<8x32xf32>
    %19 = arith.mulf %18, %17 : vector<8x32xf32>
    %20 = math.tanh %19 : vector<8x32xf32>
    %cst_17 = arith.constant 5.000000e-01 : f32
    %21 = vector.broadcast %cst_17 : f32 to vector<8x32xf32>
    %22 = arith.mulf %21, %20 : vector<8x32xf32>
    %cst_18 = arith.constant 5.000000e-01 : f32
    %23 = vector.broadcast %cst_18 : f32 to vector<8x32xf32>
    %24 = arith.addf %22, %23 : vector<8x32xf32>
    %25 = vector.extract_strided_slice %16 {offsets = [0, 32], sizes = [8, 32], strides = [1, 1]} : vector<8x128xf32> to vector<8x32xf32>
    %cst_19 = arith.constant 5.000000e-01 : f32
    %26 = vector.broadcast %cst_19 : f32 to vector<8x32xf32>
    %27 = arith.mulf %26, %25 : vector<8x32xf32>
    %28 = math.tanh %27 : vector<8x32xf32>
    %cst_20 = arith.constant 5.000000e-01 : f32
    %29 = vector.broadcast %cst_20 : f32 to vector<8x32xf32>
    %30 = arith.mulf %29, %28 : vector<8x32xf32>
    %cst_21 = arith.constant 5.000000e-01 : f32
    %31 = vector.broadcast %cst_21 : f32 to vector<8x32xf32>
    %32 = arith.addf %30, %31 : vector<8x32xf32>
    %33 = vector.extract_strided_slice %16 {offsets = [0, 64], sizes = [8, 32], strides = [1, 1]} : vector<8x128xf32> to vector<8x32xf32>
    %34 = math.tanh %33 : vector<8x32xf32>
    %35 = vector.extract_strided_slice %16 {offsets = [0, 96], sizes = [8, 32], strides = [1, 1]} : vector<8x128xf32> to vector<8x32xf32>
    %cst_22 = arith.constant 5.000000e-01 : f32
    %36 = vector.broadcast %cst_22 : f32 to vector<8x32xf32>
    %37 = arith.mulf %36, %35 : vector<8x32xf32>
    %38 = math.tanh %37 : vector<8x32xf32>
    %cst_23 = arith.constant 5.000000e-01 : f32
    %39 = vector.broadcast %cst_23 : f32 to vector<8x32xf32>
    %40 = arith.mulf %39, %38 : vector<8x32xf32>
    %cst_24 = arith.constant 5.000000e-01 : f32
    %41 = vector.broadcast %cst_24 : f32 to vector<8x32xf32>
    %42 = arith.addf %40, %41 : vector<8x32xf32>
    %43 = arith.mulf %32, %11 : vector<8x32xf32>
    %44 = arith.mulf %24, %34 : vector<8x32xf32>
    %45 = arith.addf %43, %44 : vector<8x32xf32>
    %46 = math.tanh %45 : vector<8x32xf32>
    %47 = arith.mulf %42, %46 : vector<8x32xf32>
    %c1_i32 = arith.constant 1 : i32
    %48 = arith.index_cast %c1_i32 : i32 to index
    %c0_25 = arith.constant 0 : index
    %c0_26 = arith.constant 0 : index
    %49 = vector.load %arg8[%48, %c0_25, %c0_26] : memref<8x8x128xf32, #tpu.memory_space<vmem>>, vector<1x8x128xf32>
    %50 = vector.shape_cast %49 : vector<1x8x128xf32> to vector<8x128xf32>
    %cst_27 = arith.constant dense<0.000000e+00> : vector<8x128xf32>
    %51 = tpu.matmul %47, %9, %cst_27 {dimension_numbers = #tpu.dot_dimension_numbers<[1], [0], [0], [1], [0, 0, 1, 1], [], []>} : vector<8x32xf32>, vector<32x128xf32>, vector<8x128xf32> -> vector<8x128xf32>
    %52 = arith.addf %50, %51 : vector<8x128xf32>
    %53 = vector.extract_strided_slice %52 {offsets = [0, 0], sizes = [8, 32], strides = [1, 1]} : vector<8x128xf32> to vector<8x32xf32>
    %cst_28 = arith.constant 5.000000e-01 : f32
    %54 = vector.broadcast %cst_28 : f32 to vector<8x32xf32>
    %55 = arith.mulf %54, %53 : vector<8x32xf32>
    %56 = math.tanh %55 : vector<8x32xf32>
    %cst_29 = arith.constant 5.000000e-01 : f32
    %57 = vector.broadcast %cst_29 : f32 to vector<8x32xf32>
    %58 = arith.mulf %57, %56 : vector<8x32xf32>
    %cst_30 = arith.constant 5.000000e-01 : f32
    %59 = vector.broadcast %cst_30 : f32 to vector<8x32xf32>
    %60 = arith.addf %58, %59 : vector<8x32xf32>
    %61 = vector.extract_strided_slice %52 {offsets = [0, 32], sizes = [8, 32], strides = [1, 1]} : vector<8x128xf32> to vector<8x32xf32>
    %cst_31 = arith.constant 5.000000e-01 : f32
    %62 = vector.broadcast %cst_31 : f32 to vector<8x32xf32>
    %63 = arith.mulf %62, %61 : vector<8x32xf32>
    %64 = math.tanh %63 : vector<8x32xf32>
    %cst_32 = arith.constant 5.000000e-01 : f32
    %65 = vector.broadcast %cst_32 : f32 to vector<8x32xf32>
    %66 = arith.mulf %65, %64 : vector<8x32xf32>
    %cst_33 = arith.constant 5.000000e-01 : f32
    %67 = vector.broadcast %cst_33 : f32 to vector<8x32xf32>
    %68 = arith.addf %66, %67 : vector<8x32xf32>
    %69 = vector.extract_strided_slice %52 {offsets = [0, 64], sizes = [8, 32], strides = [1, 1]} : vector<8x128xf32> to vector<8x32xf32>
    %70 = math.tanh %69 : vector<8x32xf32>
    %71 = vector.extract_strided_slice %52 {offsets = [0, 96], sizes = [8, 32], strides = [1, 1]} : vector<8x128xf32> to vector<8x32xf32>
    %cst_34 = arith.constant 5.000000e-01 : f32
    %72 = vector.broadcast %cst_34 : f32 to vector<8x32xf32>
    %73 = arith.mulf %72, %71 : vector<8x32xf32>
    %74 = math.tanh %73 : vector<8x32xf32>
    %cst_35 = arith.constant 5.000000e-01 : f32
    %75 = vector.broadcast %cst_35 : f32 to vector<8x32xf32>
    %76 = arith.mulf %75, %74 : vector<8x32xf32>
    %cst_36 = arith.constant 5.000000e-01 : f32
    %77 = vector.broadcast %cst_36 : f32 to vector<8x32xf32>
    %78 = arith.addf %76, %77 : vector<8x32xf32>
    %79 = arith.mulf %68, %45 : vector<8x32xf32>
    %80 = arith.mulf %60, %70 : vector<8x32xf32>
    %81 = arith.addf %79, %80 : vector<8x32xf32>
    %82 = math.tanh %81 : vector<8x32xf32>
    %83 = arith.mulf %78, %82 : vector<8x32xf32>
    %c2_i32 = arith.constant 2 : i32
    %84 = arith.index_cast %c2_i32 : i32 to index
    %c0_37 = arith.constant 0 : index
    %c0_38 = arith.constant 0 : index
    %85 = vector.load %arg8[%84, %c0_37, %c0_38] : memref<8x8x128xf32, #tpu.memory_space<vmem>>, vector<1x8x128xf32>
    %86 = vector.shape_cast %85 : vector<1x8x128xf32> to vector<8x128xf32>
    %cst_39 = arith.constant dense<0.000000e+00> : vector<8x128xf32>
    %87 = tpu.matmul %83, %9, %cst_39 {dimension_numbers = #tpu.dot_dimension_numbers<[1], [0], [0], [1], [0, 0, 1, 1], [], []>} : vector<8x32xf32>, vector<32x128xf32>, vector<8x128xf32> -> vector<8x128xf32>
    %88 = arith.addf %86, %87 : vector<8x128xf32>
    %89 = vector.extract_strided_slice %88 {offsets = [0, 0], sizes = [8, 32], strides = [1, 1]} : vector<8x128xf32> to vector<8x32xf32>
    %cst_40 = arith.constant 5.000000e-01 : f32
    %90 = vector.broadcast %cst_40 : f32 to vector<8x32xf32>
    %91 = arith.mulf %90, %89 : vector<8x32xf32>
    %92 = math.tanh %91 : vector<8x32xf32>
    %cst_41 = arith.constant 5.000000e-01 : f32
    %93 = vector.broadcast %cst_41 : f32 to vector<8x32xf32>
    %94 = arith.mulf %93, %92 : vector<8x32xf32>
    %cst_42 = arith.constant 5.000000e-01 : f32
    %95 = vector.broadcast %cst_42 : f32 to vector<8x32xf32>
    %96 = arith.addf %94, %95 : vector<8x32xf32>
    %97 = vector.extract_strided_slice %88 {offsets = [0, 32], sizes = [8, 32], strides = [1, 1]} : vector<8x128xf32> to vector<8x32xf32>
    %cst_43 = arith.constant 5.000000e-01 : f32
    %98 = vector.broadcast %cst_43 : f32 to vector<8x32xf32>
    %99 = arith.mulf %98, %97 : vector<8x32xf32>
    %100 = math.tanh %99 : vector<8x32xf32>
    %cst_44 = arith.constant 5.000000e-01 : f32
    %101 = vector.broadcast %cst_44 : f32 to vector<8x32xf32>
    %102 = arith.mulf %101, %100 : vector<8x32xf32>
    %cst_45 = arith.constant 5.000000e-01 : f32
    %103 = vector.broadcast %cst_45 : f32 to vector<8x32xf32>
    %104 = arith.addf %102, %103 : vector<8x32xf32>
    %105 = vector.extract_strided_slice %88 {offsets = [0, 64], sizes = [8, 32], strides = [1, 1]} : vector<8x128xf32> to vector<8x32xf32>
    %106 = math.tanh %105 : vector<8x32xf32>
    %107 = vector.extract_strided_slice %88 {offsets = [0, 96], sizes = [8, 32], strides = [1, 1]} : vector<8x128xf32> to vector<8x32xf32>
    %cst_46 = arith.constant 5.000000e-01 : f32
    %108 = vector.broadcast %cst_46 : f32 to vector<8x32xf32>
    %109 = arith.mulf %108, %107 : vector<8x32xf32>
    %110 = math.tanh %109 : vector<8x32xf32>
    %cst_47 = arith.constant 5.000000e-01 : f32
    %111 = vector.broadcast %cst_47 : f32 to vector<8x32xf32>
    %112 = arith.mulf %111, %110 : vector<8x32xf32>
    %cst_48 = arith.constant 5.000000e-01 : f32
    %113 = vector.broadcast %cst_48 : f32 to vector<8x32xf32>
    %114 = arith.addf %112, %113 : vector<8x32xf32>
    %115 = arith.mulf %104, %81 : vector<8x32xf32>
    %116 = arith.mulf %96, %106 : vector<8x32xf32>
    %117 = arith.addf %115, %116 : vector<8x32xf32>
    %118 = math.tanh %117 : vector<8x32xf32>
    %119 = arith.mulf %114, %118 : vector<8x32xf32>
    %c3_i32 = arith.constant 3 : i32
    %120 = arith.index_cast %c3_i32 : i32 to index
    %c0_49 = arith.constant 0 : index
    %c0_50 = arith.constant 0 : index
    %121 = vector.load %arg8[%120, %c0_49, %c0_50] : memref<8x8x128xf32, #tpu.memory_space<vmem>>, vector<1x8x128xf32>
    %122 = vector.shape_cast %121 : vector<1x8x128xf32> to vector<8x128xf32>
    %cst_51 = arith.constant dense<0.000000e+00> : vector<8x128xf32>
    %123 = tpu.matmul %119, %9, %cst_51 {dimension_numbers = #tpu.dot_dimension_numbers<[1], [0], [0], [1], [0, 0, 1, 1], [], []>} : vector<8x32xf32>, vector<32x128xf32>, vector<8x128xf32> -> vector<8x128xf32>
    %124 = arith.addf %122, %123 : vector<8x128xf32>
    %125 = vector.extract_strided_slice %124 {offsets = [0, 0], sizes = [8, 32], strides = [1, 1]} : vector<8x128xf32> to vector<8x32xf32>
    %cst_52 = arith.constant 5.000000e-01 : f32
    %126 = vector.broadcast %cst_52 : f32 to vector<8x32xf32>
    %127 = arith.mulf %126, %125 : vector<8x32xf32>
    %128 = math.tanh %127 : vector<8x32xf32>
    %cst_53 = arith.constant 5.000000e-01 : f32
    %129 = vector.broadcast %cst_53 : f32 to vector<8x32xf32>
    %130 = arith.mulf %129, %128 : vector<8x32xf32>
    %cst_54 = arith.constant 5.000000e-01 : f32
    %131 = vector.broadcast %cst_54 : f32 to vector<8x32xf32>
    %132 = arith.addf %130, %131 : vector<8x32xf32>
    %133 = vector.extract_strided_slice %124 {offsets = [0, 32], sizes = [8, 32], strides = [1, 1]} : vector<8x128xf32> to vector<8x32xf32>
    %cst_55 = arith.constant 5.000000e-01 : f32
    %134 = vector.broadcast %cst_55 : f32 to vector<8x32xf32>
    %135 = arith.mulf %134, %133 : vector<8x32xf32>
    %136 = math.tanh %135 : vector<8x32xf32>
    %cst_56 = arith.constant 5.000000e-01 : f32
    %137 = vector.broadcast %cst_56 : f32 to vector<8x32xf32>
    %138 = arith.mulf %137, %136 : vector<8x32xf32>
    %cst_57 = arith.constant 5.000000e-01 : f32
    %139 = vector.broadcast %cst_57 : f32 to vector<8x32xf32>
    %140 = arith.addf %138, %139 : vector<8x32xf32>
    %141 = vector.extract_strided_slice %124 {offsets = [0, 64], sizes = [8, 32], strides = [1, 1]} : vector<8x128xf32> to vector<8x32xf32>
    %142 = math.tanh %141 : vector<8x32xf32>
    %143 = vector.extract_strided_slice %124 {offsets = [0, 96], sizes = [8, 32], strides = [1, 1]} : vector<8x128xf32> to vector<8x32xf32>
    %cst_58 = arith.constant 5.000000e-01 : f32
    %144 = vector.broadcast %cst_58 : f32 to vector<8x32xf32>
    %145 = arith.mulf %144, %143 : vector<8x32xf32>
    %146 = math.tanh %145 : vector<8x32xf32>
    %cst_59 = arith.constant 5.000000e-01 : f32
    %147 = vector.broadcast %cst_59 : f32 to vector<8x32xf32>
    %148 = arith.mulf %147, %146 : vector<8x32xf32>
    %cst_60 = arith.constant 5.000000e-01 : f32
    %149 = vector.broadcast %cst_60 : f32 to vector<8x32xf32>
    %150 = arith.addf %148, %149 : vector<8x32xf32>
    %151 = arith.mulf %140, %117 : vector<8x32xf32>
    %152 = arith.mulf %132, %142 : vector<8x32xf32>
    %153 = arith.addf %151, %152 : vector<8x32xf32>
    %154 = math.tanh %153 : vector<8x32xf32>
    %155 = arith.mulf %150, %154 : vector<8x32xf32>
    %c4_i32 = arith.constant 4 : i32
    %156 = arith.index_cast %c4_i32 : i32 to index
    %c0_61 = arith.constant 0 : index
    %c0_62 = arith.constant 0 : index
    %157 = vector.load %arg8[%156, %c0_61, %c0_62] : memref<8x8x128xf32, #tpu.memory_space<vmem>>, vector<1x8x128xf32>
    %158 = vector.shape_cast %157 : vector<1x8x128xf32> to vector<8x128xf32>
    %cst_63 = arith.constant dense<0.000000e+00> : vector<8x128xf32>
    %159 = tpu.matmul %155, %9, %cst_63 {dimension_numbers = #tpu.dot_dimension_numbers<[1], [0], [0], [1], [0, 0, 1, 1], [], []>} : vector<8x32xf32>, vector<32x128xf32>, vector<8x128xf32> -> vector<8x128xf32>
    %160 = arith.addf %158, %159 : vector<8x128xf32>
    %161 = vector.extract_strided_slice %160 {offsets = [0, 0], sizes = [8, 32], strides = [1, 1]} : vector<8x128xf32> to vector<8x32xf32>
    %cst_64 = arith.constant 5.000000e-01 : f32
    %162 = vector.broadcast %cst_64 : f32 to vector<8x32xf32>
    %163 = arith.mulf %162, %161 : vector<8x32xf32>
    %164 = math.tanh %163 : vector<8x32xf32>
    %cst_65 = arith.constant 5.000000e-01 : f32
    %165 = vector.broadcast %cst_65 : f32 to vector<8x32xf32>
    %166 = arith.mulf %165, %164 : vector<8x32xf32>
    %cst_66 = arith.constant 5.000000e-01 : f32
    %167 = vector.broadcast %cst_66 : f32 to vector<8x32xf32>
    %168 = arith.addf %166, %167 : vector<8x32xf32>
    %169 = vector.extract_strided_slice %160 {offsets = [0, 32], sizes = [8, 32], strides = [1, 1]} : vector<8x128xf32> to vector<8x32xf32>
    %cst_67 = arith.constant 5.000000e-01 : f32
    %170 = vector.broadcast %cst_67 : f32 to vector<8x32xf32>
    %171 = arith.mulf %170, %169 : vector<8x32xf32>
    %172 = math.tanh %171 : vector<8x32xf32>
    %cst_68 = arith.constant 5.000000e-01 : f32
    %173 = vector.broadcast %cst_68 : f32 to vector<8x32xf32>
    %174 = arith.mulf %173, %172 : vector<8x32xf32>
    %cst_69 = arith.constant 5.000000e-01 : f32
    %175 = vector.broadcast %cst_69 : f32 to vector<8x32xf32>
    %176 = arith.addf %174, %175 : vector<8x32xf32>
    %177 = vector.extract_strided_slice %160 {offsets = [0, 64], sizes = [8, 32], strides = [1, 1]} : vector<8x128xf32> to vector<8x32xf32>
    %178 = math.tanh %177 : vector<8x32xf32>
    %179 = vector.extract_strided_slice %160 {offsets = [0, 96], sizes = [8, 32], strides = [1, 1]} : vector<8x128xf32> to vector<8x32xf32>
    %cst_70 = arith.constant 5.000000e-01 : f32
    %180 = vector.broadcast %cst_70 : f32 to vector<8x32xf32>
    %181 = arith.mulf %180, %179 : vector<8x32xf32>
    %182 = math.tanh %181 : vector<8x32xf32>
    %cst_71 = arith.constant 5.000000e-01 : f32
    %183 = vector.broadcast %cst_71 : f32 to vector<8x32xf32>
    %184 = arith.mulf %183, %182 : vector<8x32xf32>
    %cst_72 = arith.constant 5.000000e-01 : f32
    %185 = vector.broadcast %cst_72 : f32 to vector<8x32xf32>
    %186 = arith.addf %184, %185 : vector<8x32xf32>
    %187 = arith.mulf %176, %153 : vector<8x32xf32>
    %188 = arith.mulf %168, %178 : vector<8x32xf32>
    %189 = arith.addf %187, %188 : vector<8x32xf32>
    %190 = math.tanh %189 : vector<8x32xf32>
    %191 = arith.mulf %186, %190 : vector<8x32xf32>
    %c5_i32 = arith.constant 5 : i32
    %192 = arith.index_cast %c5_i32 : i32 to index
    %c0_73 = arith.constant 0 : index
    %c0_74 = arith.constant 0 : index
    %193 = vector.load %arg8[%192, %c0_73, %c0_74] : memref<8x8x128xf32, #tpu.memory_space<vmem>>, vector<1x8x128xf32>
    %194 = vector.shape_cast %193 : vector<1x8x128xf32> to vector<8x128xf32>
    %cst_75 = arith.constant dense<0.000000e+00> : vector<8x128xf32>
    %195 = tpu.matmul %191, %9, %cst_75 {dimension_numbers = #tpu.dot_dimension_numbers<[1], [0], [0], [1], [0, 0, 1, 1], [], []>} : vector<8x32xf32>, vector<32x128xf32>, vector<8x128xf32> -> vector<8x128xf32>
    %196 = arith.addf %194, %195 : vector<8x128xf32>
    %197 = vector.extract_strided_slice %196 {offsets = [0, 0], sizes = [8, 32], strides = [1, 1]} : vector<8x128xf32> to vector<8x32xf32>
    %cst_76 = arith.constant 5.000000e-01 : f32
    %198 = vector.broadcast %cst_76 : f32 to vector<8x32xf32>
    %199 = arith.mulf %198, %197 : vector<8x32xf32>
    %200 = math.tanh %199 : vector<8x32xf32>
    %cst_77 = arith.constant 5.000000e-01 : f32
    %201 = vector.broadcast %cst_77 : f32 to vector<8x32xf32>
    %202 = arith.mulf %201, %200 : vector<8x32xf32>
    %cst_78 = arith.constant 5.000000e-01 : f32
    %203 = vector.broadcast %cst_78 : f32 to vector<8x32xf32>
    %204 = arith.addf %202, %203 : vector<8x32xf32>
    %205 = vector.extract_strided_slice %196 {offsets = [0, 32], sizes = [8, 32], strides = [1, 1]} : vector<8x128xf32> to vector<8x32xf32>
    %cst_79 = arith.constant 5.000000e-01 : f32
    %206 = vector.broadcast %cst_79 : f32 to vector<8x32xf32>
    %207 = arith.mulf %206, %205 : vector<8x32xf32>
    %208 = math.tanh %207 : vector<8x32xf32>
    %cst_80 = arith.constant 5.000000e-01 : f32
    %209 = vector.broadcast %cst_80 : f32 to vector<8x32xf32>
    %210 = arith.mulf %209, %208 : vector<8x32xf32>
    %cst_81 = arith.constant 5.000000e-01 : f32
    %211 = vector.broadcast %cst_81 : f32 to vector<8x32xf32>
    %212 = arith.addf %210, %211 : vector<8x32xf32>
    %213 = vector.extract_strided_slice %196 {offsets = [0, 64], sizes = [8, 32], strides = [1, 1]} : vector<8x128xf32> to vector<8x32xf32>
    %214 = math.tanh %213 : vector<8x32xf32>
    %215 = vector.extract_strided_slice %196 {offsets = [0, 96], sizes = [8, 32], strides = [1, 1]} : vector<8x128xf32> to vector<8x32xf32>
    %cst_82 = arith.constant 5.000000e-01 : f32
    %216 = vector.broadcast %cst_82 : f32 to vector<8x32xf32>
    %217 = arith.mulf %216, %215 : vector<8x32xf32>
    %218 = math.tanh %217 : vector<8x32xf32>
    %cst_83 = arith.constant 5.000000e-01 : f32
    %219 = vector.broadcast %cst_83 : f32 to vector<8x32xf32>
    %220 = arith.mulf %219, %218 : vector<8x32xf32>
    %cst_84 = arith.constant 5.000000e-01 : f32
    %221 = vector.broadcast %cst_84 : f32 to vector<8x32xf32>
    %222 = arith.addf %220, %221 : vector<8x32xf32>
    %223 = arith.mulf %212, %189 : vector<8x32xf32>
    %224 = arith.mulf %204, %214 : vector<8x32xf32>
    %225 = arith.addf %223, %224 : vector<8x32xf32>
    %226 = math.tanh %225 : vector<8x32xf32>
    %227 = arith.mulf %222, %226 : vector<8x32xf32>
    %c6_i32 = arith.constant 6 : i32
    %228 = arith.index_cast %c6_i32 : i32 to index
    %c0_85 = arith.constant 0 : index
    %c0_86 = arith.constant 0 : index
    %229 = vector.load %arg8[%228, %c0_85, %c0_86] : memref<8x8x128xf32, #tpu.memory_space<vmem>>, vector<1x8x128xf32>
    %230 = vector.shape_cast %229 : vector<1x8x128xf32> to vector<8x128xf32>
    %cst_87 = arith.constant dense<0.000000e+00> : vector<8x128xf32>
    %231 = tpu.matmul %227, %9, %cst_87 {dimension_numbers = #tpu.dot_dimension_numbers<[1], [0], [0], [1], [0, 0, 1, 1], [], []>} : vector<8x32xf32>, vector<32x128xf32>, vector<8x128xf32> -> vector<8x128xf32>
    %232 = arith.addf %230, %231 : vector<8x128xf32>
    %233 = vector.extract_strided_slice %232 {offsets = [0, 0], sizes = [8, 32], strides = [1, 1]} : vector<8x128xf32> to vector<8x32xf32>
    %cst_88 = arith.constant 5.000000e-01 : f32
    %234 = vector.broadcast %cst_88 : f32 to vector<8x32xf32>
    %235 = arith.mulf %234, %233 : vector<8x32xf32>
    %236 = math.tanh %235 : vector<8x32xf32>
    %cst_89 = arith.constant 5.000000e-01 : f32
    %237 = vector.broadcast %cst_89 : f32 to vector<8x32xf32>
    %238 = arith.mulf %237, %236 : vector<8x32xf32>
    %cst_90 = arith.constant 5.000000e-01 : f32
    %239 = vector.broadcast %cst_90 : f32 to vector<8x32xf32>
    %240 = arith.addf %238, %239 : vector<8x32xf32>
    %241 = vector.extract_strided_slice %232 {offsets = [0, 32], sizes = [8, 32], strides = [1, 1]} : vector<8x128xf32> to vector<8x32xf32>
    %cst_91 = arith.constant 5.000000e-01 : f32
    %242 = vector.broadcast %cst_91 : f32 to vector<8x32xf32>
    %243 = arith.mulf %242, %241 : vector<8x32xf32>
    %244 = math.tanh %243 : vector<8x32xf32>
    %cst_92 = arith.constant 5.000000e-01 : f32
    %245 = vector.broadcast %cst_92 : f32 to vector<8x32xf32>
    %246 = arith.mulf %245, %244 : vector<8x32xf32>
    %cst_93 = arith.constant 5.000000e-01 : f32
    %247 = vector.broadcast %cst_93 : f32 to vector<8x32xf32>
    %248 = arith.addf %246, %247 : vector<8x32xf32>
    %249 = vector.extract_strided_slice %232 {offsets = [0, 64], sizes = [8, 32], strides = [1, 1]} : vector<8x128xf32> to vector<8x32xf32>
    %250 = math.tanh %249 : vector<8x32xf32>
    %251 = vector.extract_strided_slice %232 {offsets = [0, 96], sizes = [8, 32], strides = [1, 1]} : vector<8x128xf32> to vector<8x32xf32>
    %cst_94 = arith.constant 5.000000e-01 : f32
    %252 = vector.broadcast %cst_94 : f32 to vector<8x32xf32>
    %253 = arith.mulf %252, %251 : vector<8x32xf32>
    %254 = math.tanh %253 : vector<8x32xf32>
    %cst_95 = arith.constant 5.000000e-01 : f32
    %255 = vector.broadcast %cst_95 : f32 to vector<8x32xf32>
    %256 = arith.mulf %255, %254 : vector<8x32xf32>
    %cst_96 = arith.constant 5.000000e-01 : f32
    %257 = vector.broadcast %cst_96 : f32 to vector<8x32xf32>
    %258 = arith.addf %256, %257 : vector<8x32xf32>
    %259 = arith.mulf %248, %225 : vector<8x32xf32>
    %260 = arith.mulf %240, %250 : vector<8x32xf32>
    %261 = arith.addf %259, %260 : vector<8x32xf32>
    %262 = math.tanh %261 : vector<8x32xf32>
    %263 = arith.mulf %258, %262 : vector<8x32xf32>
    %c7_i32 = arith.constant 7 : i32
    %264 = arith.index_cast %c7_i32 : i32 to index
    %c0_97 = arith.constant 0 : index
    %c0_98 = arith.constant 0 : index
    %265 = vector.load %arg8[%264, %c0_97, %c0_98] : memref<8x8x128xf32, #tpu.memory_space<vmem>>, vector<1x8x128xf32>
    %266 = vector.shape_cast %265 : vector<1x8x128xf32> to vector<8x128xf32>
    %cst_99 = arith.constant dense<0.000000e+00> : vector<8x128xf32>
    %267 = tpu.matmul %263, %9, %cst_99 {dimension_numbers = #tpu.dot_dimension_numbers<[1], [0], [0], [1], [0, 0, 1, 1], [], []>} : vector<8x32xf32>, vector<32x128xf32>, vector<8x128xf32> -> vector<8x128xf32>
    %268 = arith.addf %266, %267 : vector<8x128xf32>
    %269 = vector.extract_strided_slice %268 {offsets = [0, 0], sizes = [8, 32], strides = [1, 1]} : vector<8x128xf32> to vector<8x32xf32>
    %cst_100 = arith.constant 5.000000e-01 : f32
    %270 = vector.broadcast %cst_100 : f32 to vector<8x32xf32>
    %271 = arith.mulf %270, %269 : vector<8x32xf32>
    %272 = math.tanh %271 : vector<8x32xf32>
    %cst_101 = arith.constant 5.000000e-01 : f32
    %273 = vector.broadcast %cst_101 : f32 to vector<8x32xf32>
    %274 = arith.mulf %273, %272 : vector<8x32xf32>
    %cst_102 = arith.constant 5.000000e-01 : f32
    %275 = vector.broadcast %cst_102 : f32 to vector<8x32xf32>
    %276 = arith.addf %274, %275 : vector<8x32xf32>
    %277 = vector.extract_strided_slice %268 {offsets = [0, 32], sizes = [8, 32], strides = [1, 1]} : vector<8x128xf32> to vector<8x32xf32>
    %cst_103 = arith.constant 5.000000e-01 : f32
    %278 = vector.broadcast %cst_103 : f32 to vector<8x32xf32>
    %279 = arith.mulf %278, %277 : vector<8x32xf32>
    %280 = math.tanh %279 : vector<8x32xf32>
    %cst_104 = arith.constant 5.000000e-01 : f32
    %281 = vector.broadcast %cst_104 : f32 to vector<8x32xf32>
    %282 = arith.mulf %281, %280 : vector<8x32xf32>
    %cst_105 = arith.constant 5.000000e-01 : f32
    %283 = vector.broadcast %cst_105 : f32 to vector<8x32xf32>
    %284 = arith.addf %282, %283 : vector<8x32xf32>
    %285 = vector.extract_strided_slice %268 {offsets = [0, 64], sizes = [8, 32], strides = [1, 1]} : vector<8x128xf32> to vector<8x32xf32>
    %286 = math.tanh %285 : vector<8x32xf32>
    %287 = vector.extract_strided_slice %268 {offsets = [0, 96], sizes = [8, 32], strides = [1, 1]} : vector<8x128xf32> to vector<8x32xf32>
    %cst_106 = arith.constant 5.000000e-01 : f32
    %288 = vector.broadcast %cst_106 : f32 to vector<8x32xf32>
    %289 = arith.mulf %288, %287 : vector<8x32xf32>
    %290 = math.tanh %289 : vector<8x32xf32>
    %cst_107 = arith.constant 5.000000e-01 : f32
    %291 = vector.broadcast %cst_107 : f32 to vector<8x32xf32>
    %292 = arith.mulf %291, %290 : vector<8x32xf32>
    %cst_108 = arith.constant 5.000000e-01 : f32
    %293 = vector.broadcast %cst_108 : f32 to vector<8x32xf32>
    %294 = arith.addf %292, %293 : vector<8x32xf32>
    %295 = arith.mulf %284, %261 : vector<8x32xf32>
    %296 = arith.mulf %276, %286 : vector<8x32xf32>
    %297 = arith.addf %295, %296 : vector<8x32xf32>
    %298 = math.tanh %297 : vector<8x32xf32>
    %299 = arith.mulf %294, %298 : vector<8x32xf32>
    %c8_i32 = arith.constant 8 : i32
    %c0_109 = arith.constant 0 : index
    %c0_110 = arith.constant 0 : index
    %300 = vector.load %arg5[%c0_109, %c0_110] : memref<32x128xf32, #tpu.memory_space<vmem>>, vector<32x128xf32>
    %cst_111 = arith.constant dense<0.000000e+00> : vector<8x128xf32>
    %301 = tpu.matmul %299, %300, %cst_111 {dimension_numbers = #tpu.dot_dimension_numbers<[1], [0], [0], [1], [0, 0, 1, 1], [], []>} : vector<8x32xf32>, vector<32x128xf32>, vector<8x128xf32> -> vector<8x128xf32>
    %c0_112 = arith.constant 0 : index
    %c0_113 = arith.constant 0 : index
    %302 = vector.load %arg6[%c0_112, %c0_113] : memref<1x128xf32, #tpu.memory_space<vmem>>, vector<1x128xf32>
    %303 = vector.broadcast %302 : vector<1x128xf32> to vector<8x128xf32>
    %304 = arith.addf %301, %303 : vector<8x128xf32>
    %c0_114 = arith.constant 0 : index
    %c0_115 = arith.constant 0 : index
    %305 = vector.load %arg7[%c0_114, %c0_115] : memref<8x128xf32, #tpu.memory_space<vmem>>, vector<8x128xf32>
    tpu.vector_store %arg7[%c0_114, %c0_115], %304 {strides = array<i32>} : memref<8x128xf32, #tpu.memory_space<vmem>>, vector<8x128xf32>,
    return
  }
  func.func @transform_0(%arg0: i32) -> (i32, i32, i32) {
    %c0_i32 = arith.constant 0 : i32
    %c0_i32_0 = arith.constant 0 : i32
    %c0_i32_1 = arith.constant 0 : i32
    %c0_i32_2 = arith.constant 0 : i32
    return %c0_i32, %c0_i32_0, %c0_i32_1 : i32, i32, i32
  }
  func.func @transform_1(%arg0: i32) -> (i32, i32) {
    %c0_i32 = arith.constant 0 : i32
    %c0_i32_0 = arith.constant 0 : i32
    %c0_i32_1 = arith.constant 0 : i32
    return %c0_i32, %c0_i32_0 : i32, i32
  }
  func.func @transform_2(%arg0: i32) -> (i32, i32) {
    %c0_i32 = arith.constant 0 : i32
    %c0_i32_0 = arith.constant 0 : i32
    %c0_i32_1 = arith.constant 0 : i32
    return %c0_i32, %c0_i32_0 : i32, i32
  }
  func.func @transform_3(%arg0: i32) -> (i32, i32) {
    %c0_i32 = arith.constant 0 : i32
    %c0_i32_0 = arith.constant 0 : i32
    %c0_i32_1 = arith.constant 0 : i32
    return %c0_i32, %c0_i32_0 : i32, i32
  }
  func.func @transform_4(%arg0: i32) -> (i32, i32) {
    %c0_i32 = arith.constant 0 : i32
    %c0_i32_0 = arith.constant 0 : i32
    %c0_i32_1 = arith.constant 0 : i32
    return %c0_i32, %c0_i32_0 : i32, i32
  }
  func.func @transform_5(%arg0: i32) -> (i32, i32) {
    %c0_i32 = arith.constant 0 : i32
    %c0_i32_0 = arith.constant 0 : i32
    %c0_i32_1 = arith.constant 0 : i32
    return %c0_i32, %c0_i32_0 : i32, i32
  }
  func.func @transform_6(%arg0: i32) -> (i32, i32) {
    %c0_i32 = arith.constant 0 : i32
    %c0_i32_0 = arith.constant 0 : i32
    %c0_i32_1 = arith.constant 0 : i32
    return %c0_i32, %c0_i32_0 : i32, i32
  }
}

</mosaic_0001>

<llo_original>
// kernel: tpu_custom_call.1
$region0: #{tpu_custom_call.1}
  #allocation0 [shape = 'u32[]', space=smem, size = 0x4, offset = 0x4, fixed_abs, tag = 'smem constant byte address 0x4 - core index']
  #allocation1 [shape = 'u32[144,128]{1,0:T(1,128)}', space=vmem, size = 0x12000, scoped, tag = 'internal scratch']
  #allocation2 [shape = 'f32[8,8,128]{2,1,0:T(8,128)}', space=vmem, size = 0x8000, scoped, tag = 'scratch operand']
  %s0 = inlined_call_operand.vmem [shape: f32[8,8,4], index: 0, kind: input, shape index: {}]
  %s1 = inlined_call_operand.vmem [shape: f32[4,128], index: 1, kind: input, shape index: {}]
  %s2 = inlined_call_operand.vmem [shape: f32[32,128], index: 2, kind: input, shape index: {}]
  %s3 = inlined_call_operand.vmem [shape: f32[1,128], index: 3, kind: input, shape index: {}]
  %s4 = inlined_call_operand.vmem [shape: f32[32,128], index: 4, kind: input, shape index: {}]
  %s5 = inlined_call_operand.vmem [shape: f32[1,128], index: 5, kind: input, shape index: {}]
  %s6 = inlined_call_operand.hbm [shape: f32[8,128], index: 6, kind: output, shape index: {}]
  %s7 = sld [smem:[#allocation0]]
  $region34: #{tpu_custom_call.1} parent=0
    _
  %s9 = ssub.s32 1, %s7
  %s10 = scalar_select 0, %s9, %s7
  $region1: #{tpu_custom_call.1} parent=0
    #allocation3 [shape = 'u8[4096]{0}', space=vmem, size = 0x1000, scoped, tag = 'output window, operand 0, single buffered']
    #allocation4 [shape = 's32[1]{0}', space=sflag, size = 0x4, scoped, tag = 'scoped memory for tpu_custom_call.1']
    %11 = vsyncpa [#allocation4], 0
    // Predicated region
    $region2: #{tpu_custom_call.1} parent=1 // pred_check
      _
    $region3: #{tpu_custom_call.1} parent=1 // pred_check_branch
      %13 = sbr.rel (0) target = $region5
    $region4: #{tpu_custom_call.1} parent=1 // pred_region
      _
    $region5: #{tpu_custom_call.1} parent=1 // pred_fallthru
      _
    // Predicated region
    $region6: #{tpu_custom_call.1} parent=1 // pred_check
      _
    $region7: #{tpu_custom_call.1} parent=1 // pred_check_branch
      %15 = sbr.rel (0) target = $region9
    $region8: #{tpu_custom_call.1} parent=1 // pred_region
      _
    $region9: #{tpu_custom_call.1} parent=1 // pred_fallthru
      _
    // Predicated region
    $region10: #{tpu_custom_call.1} parent=1 // pred_check
      _
    $region11: #{tpu_custom_call.1} parent=1 // pred_check_branch
      %17 = sbr.rel (0) target = $region13
    $region12: #{tpu_custom_call.1} parent=1 // pred_region
      _
    $region13: #{tpu_custom_call.1} parent=1 // pred_fallthru
      _
    // Predicated region
    $region14: #{tpu_custom_call.1} parent=1 // pred_check
      _
    $region15: #{tpu_custom_call.1} parent=1 // pred_check_branch
      %19 = sbr.rel (0) target = $region17
    $region16: #{tpu_custom_call.1} parent=1 // pred_region
      _
    $region17: #{tpu_custom_call.1} parent=1 // pred_fallthru
      _
    // Predicated region
    $region18: #{tpu_custom_call.1} parent=1 // pred_check
      _
    $region19: #{tpu_custom_call.1} parent=1 // pred_check_branch
      %21 = sbr.rel (0) target = $region21
    $region20: #{tpu_custom_call.1} parent=1 // pred_region
      _
    $region21: #{tpu_custom_call.1} parent=1 // pred_fallthru
      _
    // Predicated region
    $region22: #{tpu_custom_call.1} parent=1 // pred_check
      _
    $region23: #{tpu_custom_call.1} parent=1 // pred_check_branch
      %23 = sbr.rel (0) target = $region25
    $region24: #{tpu_custom_call.1} parent=1 // pred_region
      _
    $region25: #{tpu_custom_call.1} parent=1 // pred_fallthru
      _
    %v24 = vld [vmem:[%s0] sm:$0xff]
    %v25 = vld [vmem:[%s0 + $0x8] sm:$0xff]
    %v26 = vld [vmem:[%s0 + $0x10] sm:$0xff]
    %v27 = vld [vmem:[%s0 + $0x18] sm:$0xff]
    %v28 = vld [vmem:[%s0 + $0x20] sm:$0xff]
    %v29 = vld [vmem:[%s0 + $0x28] sm:$0xff]
    %v30 = vld [vmem:[%s0 + $0x30] sm:$0xff]
    %v31 = vld [vmem:[%s0 + $0x38] sm:$0xff]
    %v32 = vld [vmem:[%s1] sm:$0xf]
    %v33 = vld [vmem:[%s3] sm:$0x1]
    %v35 = vlaneseq
    %v36 = vshrl.u32 %v35, 7
    %v37 = vsub.s32 0, %v36
    %v38 = vrot.slane %v33, %v37
    %vm40 = vcmask 31744
    %v42 = vsel %vm40, %v24, 0
    %v45 = vsel %vm40, %v25, 0
    %v48 = vsel %vm40, %v26, 0
    %v51 = vsel %vm40, %v27, 0
    %v54 = vsel %vm40, %v28, 0
    %v57 = vsel %vm40, %v29, 0
    %v60 = vsel %vm40, %v30, 0
    %v63 = vsel %vm40, %v31, 0
    %vm65 = vcmask 1043456
    %v67 = vsel %vm65, %v32, 0
    %69 = vmatprep.subr.mxu0 0.0
    %70 = vmatpush1.msra.mxu0 0.0
    %71 = vmatprep.subr.mxu0 0.0
    %72 = vmatpush1.msra.mxu0 0.0
    %73 = vmatprep.subr.mxu0 0.0
    %74 = vmatpush1.msra.mxu0 0.0
    %75 = vmatprep.subr.mxu0 0.0
    %76 = vmatpush1.msra.mxu0 0.0
    %77 = vmatprep.subr.mxu0 0.0
    %78 = vmatpush1.msra.mxu0 0.0
    %79 = vmatprep.subr.mxu0 0.0
    %80 = vmatpush1.msra.mxu0 0.0
    %81 = vmatprep.subr.mxu0 0.0
    %82 = vmatpush1.msra.mxu0 0.0
    %83 = vmatprep.subr.mxu0 0.0
    %84 = vmatpush1.msra.mxu0 0.0
    %85 = vmatprep.subr.mxu0 0.0
    %86 = vmatpush1.msra.mxu0 0.0
    %87 = vmatprep.subr.mxu0 0.0
    %88 = vmatpush1.msra.mxu0 0.0
    %89 = vmatprep.subr.mxu0 0.0
    %90 = vmatpush1.msra.mxu0 0.0
    %91 = vmatprep.subr.mxu0 0.0
    %92 = vmatpush1.msra.mxu0 0.0
    %93 = vmatprep.subr.mxu0 0.0
    %94 = vmatpush1.msra.mxu0 0.0
    %95 = vmatprep.subr.mxu0 0.0
    %96 = vmatpush1.msra.mxu0 0.0
    %97 = vmatprep.subr.mxu0 0.0
    %98 = vmatpush1.msra.mxu0 0.0
    %99 = vmatprep.subr.mxu0 0.0
    %100 = vmatpush1.msra.mxu0 %v67
    %101 = vmatprep.subr.mxu0 0.0
    %102 = vmatpush2.msra.mxu0 0.0
    %103 = vmatprep.subr.mxu0 0.0
    %104 = vmatpush2.msra.mxu0 0.0
    %105 = vmatprep.subr.mxu0 0.0
    %106 = vmatpush2.msra.mxu0 0.0
    %107 = vmatprep.subr.mxu0 0.0
    %108 = vmatpush2.msra.mxu0 0.0
    %109 = vmatprep.subr.mxu0 0.0
    %110 = vmatpush2.msra.mxu0 0.0
    %111 = vmatprep.subr.mxu0 0.0
    %112 = vmatpush2.msra.mxu0 0.0
    %113 = vmatprep.subr.mxu0 0.0
    %114 = vmatpush2.msra.mxu0 0.0
    %115 = vmatprep.subr.mxu0 0.0
    %116 = vmatpush2.msra.mxu0 0.0
    %117 = vmatprep.subr.mxu0 0.0
    %118 = vmatpush2.msra.mxu0 0.0
    %119 = vmatprep.subr.mxu0 0.0
    %120 = vmatpush2.msra.mxu0 0.0
    %121 = vmatprep.subr.mxu0 0.0
    %122 = vmatpush2.msra.mxu0 0.0
    %123 = vmatprep.subr.mxu0 0.0
    %124 = vmatpush2.msra.mxu0 0.0
    %125 = vmatprep.subr.mxu0 0.0
    %126 = vmatpush2.msra.mxu0 0.0
    %127 = vmatprep.subr.mxu0 0.0
    %128 = vmatpush2.msra.mxu0 0.0
    %129 = vmatprep.subr.mxu0 0.0
    %130 = vmatpush2.msra.mxu0 0.0
    %131 = vmatprep.subr.mxu0 0.0
    %132 = vmatpush2.msra.mxu0 0.0
    %133 = vmatprep.mubr.f32.mxu0 0.0
    %134 = vmatmul.mubr.f32.gmra.mxu0 %v42
    %v135 = vpop.f32.mrf.mxu0
    %v136 = vadd.f32 %v38, %v135
    %v137 = vpop.f32.mrf.mxu0
    %138 = vmatprep.mubr.f32.mxu0 0.0
    %139 = vmatmul.mubr.f32.gmra.mxu0 %v45
    %v140 = vpop.f32.mrf.mxu0
    %v141 = vadd.f32 %v38, %v140
    %v142 = vpop.f32.mrf.mxu0
    %143 = vmatprep.mubr.f32.mxu0 0.0
    %144 = vmatmul.mubr.f32.gmra.mxu0 %v48
    %v145 = vpop.f32.mrf.mxu0
    %v146 = vadd.f32 %v38, %v145
    %v147 = vpop.f32.mrf.mxu0
    %148 = vmatprep.mubr.f32.mxu0 0.0
    %149 = vmatmul.mubr.f32.gmra.mxu0 %v51
    %v150 = vpop.f32.mrf.mxu0
    %v151 = vadd.f32 %v38, %v150
    %v152 = vpop.f32.mrf.mxu0
    %153 = vmatprep.mubr.f32.mxu0 0.0
    %154 = vmatmul.mubr.f32.gmra.mxu0 %v54
    %v155 = vpop.f32.mrf.mxu0
    %v156 = vadd.f32 %v38, %v155
    %v157 = vpop.f32.mrf.mxu0
    %158 = vmatprep.mubr.f32.mxu0 0.0
    %159 = vmatmul.mubr.f32.gmra.mxu0 %v57
    %v160 = vpop.f32.mrf.mxu0
    %v161 = vadd.f32 %v38, %v160
    %v162 = vpop.f32.mrf.mxu0
    %163 = vmatprep.mubr.f32.mxu0 0.0
    %164 = vmatmul.mubr.f32.gmra.mxu0 %v60
    %v165 = vpop.f32.mrf.mxu0
    %v166 = vadd.f32 %v38, %v165
    %v167 = vpop.f32.mrf.mxu0
    %168 = vmatprep.mubr.f32.mxu0 0.0
    %169 = vmatmul.mubr.f32.gmra.mxu0 %v63
    %v170 = vpop.f32.mrf.mxu0
    %v171 = vadd.f32 %v38, %v170
    %v172 = vpop.f32.mrf.mxu0
    %173 = vdwg.mxu0
    %174 = vst [vmem:[#allocation2] sm:$0xff] %v136
    %175 = vst [vmem:[#allocation2 + $0x8] sm:$0xff] %v141
    %176 = vst [vmem:[#allocation2 + $0x10] sm:$0xff] %v146
    %177 = vst [vmem:[#allocation2 + $0x18] sm:$0xff] %v151
    %178 = vst [vmem:[#allocation2 + $0x20] sm:$0xff] %v156
    %179 = vst [vmem:[#allocation2 + $0x28] sm:$0xff] %v161
    %180 = vst [vmem:[#allocation2 + $0x30] sm:$0xff] %v166
    %181 = vst [vmem:[#allocation2 + $0x38] sm:$0xff] %v171
    %v182 = vld [vmem:[%s2] sm:$0xff]
    %v183 = vld [vmem:[%s2 + $0x8] sm:$0xff]
    %v184 = vld [vmem:[%s2 + $0x10] sm:$0xff]
    %v185 = vld [vmem:[%s2 + $0x18] sm:$0xff]
    %v186 = vld [vmem:[#allocation2] sm:$0xff]
    %vm187 = vcmask 261120
    %v189 = vsel %vm187, 0.0, 0
    %191 = vmatprep.subr.mxu0 0.0
    %192 = vmatpush1.msra.mxu0 0.0
    %193 = vmatprep.subr.mxu0 0.0
    %194 = vmatpush1.msra.mxu0 0.0
    %195 = vmatprep.subr.mxu0 0.0
    %196 = vmatpush1.msra.mxu0 0.0
    %197 = vmatprep.subr.mxu0 0.0
    %198 = vmatpush1.msra.mxu0 0.0
    %199 = vmatprep.subr.mxu0 0.0
    %200 = vmatpush1.msra.mxu0 0.0
    %201 = vmatprep.subr.mxu0 0.0
    %202 = vmatpush1.msra.mxu0 0.0
    %203 = vmatprep.subr.mxu0 0.0
    %204 = vmatpush1.msra.mxu0 0.0
    %205 = vmatprep.subr.mxu0 0.0
    %206 = vmatpush1.msra.mxu0 0.0
    %207 = vmatprep.subr.mxu0 0.0
    %208 = vmatpush1.msra.mxu0 0.0
    %209 = vmatprep.subr.mxu0 0.0
    %210 = vmatpush1.msra.mxu0 0.0
    %211 = vmatprep.subr.mxu0 0.0
    %212 = vmatpush1.msra.mxu0 0.0
    %213 = vmatprep.subr.mxu0 0.0
    %214 = vmatpush1.msra.mxu0 0.0
    %215 = vmatprep.subr.mxu0 0.0
    %216 = vmatpush1.msra.mxu0 %v185
    %217 = vmatprep.subr.mxu0 0.0
    %218 = vmatpush1.msra.mxu0 %v184
    %219 = vmatprep.subr.mxu0 0.0
    %220 = vmatpush1.msra.mxu0 %v183
    %221 = vmatprep.subr.mxu0 0.0
    %222 = vmatpush1.msra.mxu0 %v182
    %223 = vmatprep.subr.mxu0 0.0
    %224 = vmatpush2.msra.mxu0 0.0
    %225 = vmatprep.subr.mxu0 0.0
    %226 = vmatpush2.msra.mxu0 0.0
    %227 = vmatprep.subr.mxu0 0.0
    %228 = vmatpush2.msra.mxu0 0.0
    %229 = vmatprep.subr.mxu0 0.0
    %230 = vmatpush2.msra.mxu0 0.0
    %231 = vmatprep.subr.mxu0 0.0
    %232 = vmatpush2.msra.mxu0 0.0
    %233 = vmatprep.subr.mxu0 0.0
    %234 = vmatpush2.msra.mxu0 0.0
    %235 = vmatprep.subr.mxu0 0.0
    %236 = vmatpush2.msra.mxu0 0.0
    %237 = vmatprep.subr.mxu0 0.0
    %238 = vmatpush2.msra.mxu0 0.0
    %239 = vmatprep.subr.mxu0 0.0
    %240 = vmatpush2.msra.mxu0 0.0
    %241 = vmatprep.subr.mxu0 0.0
    %242 = vmatpush2.msra.mxu0 0.0
    %243 = vmatprep.subr.mxu0 0.0
    %244 = vmatpush2.msra.mxu0 0.0
    %245 = vmatprep.subr.mxu0 0.0
    %246 = vmatpush2.msra.mxu0 0.0
    %247 = vmatprep.subr.mxu0 0.0
    %248 = vmatpush2.msra.mxu0 0.0
    %249 = vmatprep.subr.mxu0 0.0
    %250 = vmatpush2.msra.mxu0 0.0
    %251 = vmatprep.subr.mxu0 0.0
    %252 = vmatpush2.msra.mxu0 0.0
    %253 = vmatprep.subr.mxu0 0.0
    %254 = vmatpush2.msra.mxu0 0.0
    %255 = vmatprep.mubr.f32.mxu0 0.0
    %256 = vmatmul.mubr.f32.gmra.mxu0 %v189
    %v257 = vpop.f32.mrf.mxu0
    %v258 = vadd.f32 0.0, %v257
    %v259 = vpop.f32.mrf.mxu0
    %260 = vdwg.mxu0
    %v261 = vadd.f32 %v186, %v258
    %v262 = vmul.f32 %v261, 0.5
    %v263 = vtanh.pop %v262
    %v264 = vmul.f32 %v263, 0.5
    %v265 = vadd.f32 %v264, 0.5
    %v266 = vtanh.pop %v261
    %v267 = vmul.f32 %v265, 0.0
    %269 = vrot.lane.b32.xlu0 %v266, 64
    %v270 = vpop.permute.xlu0 %269
    %v272 = vmul.f32 %v265, %v270
    %274 = vrot.lane.b32.xlu0 %v272, 32
    %v275 = vpop.permute.xlu0 %274
    %v277 = vadd.f32 %v267, %v275
    %v278 = vtanh.pop %v277
    %280 = vrot.lane.b32.xlu0 %v278, 64
    %v281 = vpop.permute.xlu0 %280
    %v283 = vmul.f32 %v265, %v281
    %s284 = scalar_lea.vmem [#allocation2], 8
    %v285 = vld [vmem:[%s284] sm:$0xff]
    %287 = vrot.lane.b32.xlu0 %v283, 32
    %v288 = vpop.permute.xlu0 %287
    %v289 = vsel %vm187, %v288, 0
    %291 = vmatprep.subr.mxu0 0.0
    %292 = vmatpush1.msra.mxu0 0.0
    %293 = vmatprep.subr.mxu0 0.0
    %294 = vmatpush1.msra.mxu0 0.0
    %295 = vmatprep.subr.mxu0 0.0
    %296 = vmatpush1.msra.mxu0 0.0
    %297 = vmatprep.subr.mxu0 0.0
    %298 = vmatpush1.msra.mxu0 0.0
    %299 = vmatprep.subr.mxu0 0.0
    %300 = vmatpush1.msra.mxu0 0.0
    %301 = vmatprep.subr.mxu0 0.0
    %302 = vmatpush1.msra.mxu0 0.0
    %303 = vmatprep.subr.mxu0 0.0
    %304 = vmatpush1.msra.mxu0 0.0
    %305 = vmatprep.subr.mxu0 0.0
    %306 = vmatpush1.msra.mxu0 0.0
    %307 = vmatprep.subr.mxu0 0.0
    %308 = vmatpush1.msra.mxu0 0.0
    %309 = vmatprep.subr.mxu0 0.0
    %310 = vmatpush1.msra.mxu0 0.0
    %311 = vmatprep.subr.mxu0 0.0
    %312 = vmatpush1.msra.mxu0 0.0
    %313 = vmatprep.subr.mxu0 0.0
    %314 = vmatpush1.msra.mxu0 0.0
    %315 = vmatprep.subr.mxu0 0.0
    %316 = vmatpush1.msra.mxu0 %v185
    %317 = vmatprep.subr.mxu0 0.0
    %318 = vmatpush1.msra.mxu0 %v184
    %319 = vmatprep.subr.mxu0 0.0
    %320 = vmatpush1.msra.mxu0 %v183
    %321 = vmatprep.subr.mxu0 0.0
    %322 = vmatpush1.msra.mxu0 %v182
    %323 = vmatprep.subr.mxu0 0.0
    %324 = vmatpush2.msra.mxu0 0.0
    %325 = vmatprep.subr.mxu0 0.0
    %326 = vmatpush2.msra.mxu0 0.0
    %327 = vmatprep.subr.mxu0 0.0
    %328 = vmatpush2.msra.mxu0 0.0
    %329 = vmatprep.subr.mxu0 0.0
    %330 = vmatpush2.msra.mxu0 0.0
    %331 = vmatprep.subr.mxu0 0.0
    %332 = vmatpush2.msra.mxu0 0.0
    %333 = vmatprep.subr.mxu0 0.0
    %334 = vmatpush2.msra.mxu0 0.0
    %335 = vmatprep.subr.mxu0 0.0
    %336 = vmatpush2.msra.mxu0 0.0
    %337 = vmatprep.subr.mxu0 0.0
    %338 = vmatpush2.msra.mxu0 0.0
    %339 = vmatprep.subr.mxu0 0.0
    %340 = vmatpush2.msra.mxu0 0.0
    %341 = vmatprep.subr.mxu0 0.0
    %342 = vmatpush2.msra.mxu0 0.0
    %343 = vmatprep.subr.mxu0 0.0
    %344 = vmatpush2.msra.mxu0 0.0
    %345 = vmatprep.subr.mxu0 0.0
    %346 = vmatpush2.msra.mxu0 0.0
    %347 = vmatprep.subr.mxu0 0.0
    %348 = vmatpush2.msra.mxu0 0.0
    %349 = vmatprep.subr.mxu0 0.0
    %350 = vmatpush2.msra.mxu0 0.0
    %351 = vmatprep.subr.mxu0 0.0
    %352 = vmatpush2.msra.mxu0 0.0
    %353 = vmatprep.subr.mxu0 0.0
    %354 = vmatpush2.msra.mxu0 0.0
    %355 = vmatprep.mubr.f32.mxu0 0.0
    %356 = vmatmul.mubr.f32.gmra.mxu0 %v289
    %v357 = vpop.f32.mrf.mxu0
    %v358 = vadd.f32 0.0, %v357
    %v359 = vpop.f32.mrf.mxu0
    %360 = vdwg.mxu0
    %v361 = vadd.f32 %v285, %v358
    %v362 = vmul.f32 %v361, 0.5
    %v363 = vtanh.pop %v362
    %v364 = vmul.f32 %v363, 0.5
    %v365 = vadd.f32 %v364, 0.5
    %v366 = vtanh.pop %v361
    %v367 = vmul.f32 %v365, %v277
    %369 = vrot.lane.b32.xlu0 %v366, 64
    %v370 = vpop.permute.xlu0 %369
    %v372 = vmul.f32 %v365, %v370
    %374 = vrot.lane.b32.xlu0 %v372, 32
    %v375 = vpop.permute.xlu0 %374
    %v377 = vadd.f32 %v367, %v375
    %v378 = vtanh.pop %v377
    %380 = vrot.lane.b32.xlu0 %v378, 64
    %v381 = vpop.permute.xlu0 %380
    %v383 = vmul.f32 %v365, %v381
    %s384 = scalar_lea.vmem [#allocation2], 16
    %v385 = vld [vmem:[%s384] sm:$0xff]
    %387 = vrot.lane.b32.xlu0 %v383, 32
    %v388 = vpop.permute.xlu0 %387
    %v389 = vsel %vm187, %v388, 0
    %391 = vmatprep.subr.mxu0 0.0
    %392 = vmatpush1.msra.mxu0 0.0
    %393 = vmatprep.subr.mxu0 0.0
    %394 = vmatpush1.msra.mxu0 0.0
    %395 = vmatprep.subr.mxu0 0.0
    %396 = vmatpush1.msra.mxu0 0.0
    %397 = vmatprep.subr.mxu0 0.0
    %398 = vmatpush1.msra.mxu0 0.0
    %399 = vmatprep.subr.mxu0 0.0
    %400 = vmatpush1.msra.mxu0 0.0
    %401 = vmatprep.subr.mxu0 0.0
    %402 = vmatpush1.msra.mxu0 0.0
    %403 = vmatprep.subr.mxu0 0.0
    %404 = vmatpush1.msra.mxu0 0.0
    %405 = vmatprep.subr.mxu0 0.0
    %406 = vmatpush1.msra.mxu0 0.0
    %407 = vmatprep.subr.mxu0 0.0
    %408 = vmatpush1.msra.mxu0 0.0
    %409 = vmatprep.subr.mxu0 0.0
    %410 = vmatpush1.msra.mxu0 0.0
    %411 = vmatprep.subr.mxu0 0.0
    %412 = vmatpush1.msra.mxu0 0.0
    %413 = vmatprep.subr.mxu0 0.0
    %414 = vmatpush1.msra.mxu0 0.0
    %415 = vmatprep.subr.mxu0 0.0
    %416 = vmatpush1.msra.mxu0 %v185
    %417 = vmatprep.subr.mxu0 0.0
    %418 = vmatpush1.msra.mxu0 %v184
    %419 = vmatprep.subr.mxu0 0.0
    %420 = vmatpush1.msra.mxu0 %v183
    %421 = vmatprep.subr.mxu0 0.0
    %422 = vmatpush1.msra.mxu0 %v182
    %423 = vmatprep.subr.mxu0 0.0
    %424 = vmatpush2.msra.mxu0 0.0
    %425 = vmatprep.subr.mxu0 0.0
    %426 = vmatpush2.msra.mxu0 0.0
    %427 = vmatprep.subr.mxu0 0.0
    %428 = vmatpush2.msra.mxu0 0.0
    %429 = vmatprep.subr.mxu0 0.0
    %430 = vmatpush2.msra.mxu0 0.0
    %431 = vmatprep.subr.mxu0 0.0
    %432 = vmatpush2.msra.mxu0 0.0
    %433 = vmatprep.subr.mxu0 0.0
    %434 = vmatpush2.msra.mxu0 0.0
    %435 = vmatprep.subr.mxu0 0.0
    %436 = vmatpush2.msra.mxu0 0.0
    %437 = vmatprep.subr.mxu0 0.0
    %438 = vmatpush2.msra.mxu0 0.0
    %439 = vmatprep.subr.mxu0 0.0
    %440 = vmatpush2.msra.mxu0 0.0
    %441 = vmatprep.subr.mxu0 0.0
    %442 = vmatpush2.msra.mxu0 0.0
    %443 = vmatprep.subr.mxu0 0.0
    %444 = vmatpush2.msra.mxu0 0.0
    %445 = vmatprep.subr.mxu0 0.0
    %446 = vmatpush2.msra.mxu0 0.0
    %447 = vmatprep.subr.mxu0 0.0
    %448 = vmatpush2.msra.mxu0 0.0
    %449 = vmatprep.subr.mxu0 0.0
    %450 = vmatpush2.msra.mxu0 0.0
    %451 = vmatprep.subr.mxu0 0.0
    %452 = vmatpush2.msra.mxu0 0.0
    %453 = vmatprep.subr.mxu0 0.0
    %454 = vmatpush2.msra.mxu0 0.0
    %455 = vmatprep.mubr.f32.mxu0 0.0
    %456 = vmatmul.mubr.f32.gmra.mxu0 %v389
    %v457 = vpop.f32.mrf.mxu0
    %v458 = vadd.f32 0.0, %v457
    %v459 = vpop.f32.mrf.mxu0
    %460 = vdwg.mxu0
    %v461 = vadd.f32 %v385, %v458
    %v462 = vmul.f32 %v461, 0.5
    %v463 = vtanh.pop %v462
    %v464 = vmul.f32 %v463, 0.5
    %v465 = vadd.f32 %v464, 0.5
    %v466 = vtanh.pop %v461
    %v467 = vmul.f32 %v465, %v377
    %469 = vrot.lane.b32.xlu0 %v466, 64
    %v470 = vpop.permute.xlu0 %469
    %v472 = vmul.f32 %v465, %v470
    %474 = vrot.lane.b32.xlu0 %v472, 32
    %v475 = vpop.permute.xlu0 %474
    %v477 = vadd.f32 %v467, %v475
    %v478 = vtanh.pop %v477
    %480 = vrot.lane.b32.xlu0 %v478, 64
    %v481 = vpop.permute.xlu0 %480
    %v483 = vmul.f32 %v465, %v481
    %s484 = scalar_lea.vmem [#allocation2], 24
    %v485 = vld [vmem:[%s484] sm:$0xff]
    %487 = vrot.lane.b32.xlu0 %v483, 32
    %v488 = vpop.permute.xlu0 %487
    %v489 = vsel %vm187, %v488, 0
    %491 = vmatprep.subr.mxu0 0.0
    %492 = vmatpush1.msra.mxu0 0.0
    %493 = vmatprep.subr.mxu0 0.0
    %494 = vmatpush1.msra.mxu0 0.0
    %495 = vmatprep.subr.mxu0 0.0
    %496 = vmatpush1.msra.mxu0 0.0
    %497 = vmatprep.subr.mxu0 0.0
    %498 = vmatpush1.msra.mxu0 0.0
    %499 = vmatprep.subr.mxu0 0.0
    %500 = vmatpush1.msra.mxu0 0.0
    %501 = vmatprep.subr.mxu0 0.0
    %502 = vmatpush1.msra.mxu0 0.0
    %503 = vmatprep.subr.mxu0 0.0
    %504 = vmatpush1.msra.mxu0 0.0
    %505 = vmatprep.subr.mxu0 0.0
    %506 = vmatpush1.msra.mxu0 0.0
    %507 = vmatprep.subr.mxu0 0.0
    %508 = vmatpush1.msra.mxu0 0.0
    %509 = vmatprep.subr.mxu0 0.0
    %510 = vmatpush1.msra.mxu0 0.0
    %511 = vmatprep.subr.mxu0 0.0
    %512 = vmatpush1.msra.mxu0 0.0
    %513 = vmatprep.subr.mxu0 0.0
    %514 = vmatpush1.msra.mxu0 0.0
    %515 = vmatprep.subr.mxu0 0.0
    %516 = vmatpush1.msra.mxu0 %v185
    %517 = vmatprep.subr.mxu0 0.0
    %518 = vmatpush1.msra.mxu0 %v184
    %519 = vmatprep.subr.mxu0 0.0
    %520 = vmatpush1.msra.mxu0 %v183
    %521 = vmatprep.subr.mxu0 0.0
    %522 = vmatpush1.msra.mxu0 %v182
    %523 = vmatprep.subr.mxu0 0.0
    %524 = vmatpush2.msra.mxu0 0.0
    %525 = vmatprep.subr.mxu0 0.0
    %526 = vmatpush2.msra.mxu0 0.0
    %527 = vmatprep.subr.mxu0 0.0
    %528 = vmatpush2.msra.mxu0 0.0
    %529 = vmatprep.subr.mxu0 0.0
    %530 = vmatpush2.msra.mxu0 0.0
    %531 = vmatprep.subr.mxu0 0.0
    %532 = vmatpush2.msra.mxu0 0.0
    %533 = vmatprep.subr.mxu0 0.0
    %534 = vmatpush2.msra.mxu0 0.0
    %535 = vmatprep.subr.mxu0 0.0
    %536 = vmatpush2.msra.mxu0 0.0
    %537 = vmatprep.subr.mxu0 0.0
    %538 = vmatpush2.msra.mxu0 0.0
    %539 = vmatprep.subr.mxu0 0.0
    %540 = vmatpush2.msra.mxu0 0.0
    %541 = vmatprep.subr.mxu0 0.0
    %542 = vmatpush2.msra.mxu0 0.0
    %543 = vmatprep.subr.mxu0 0.0
    %544 = vmatpush2.msra.mxu0 0.0
    %545 = vmatprep.subr.mxu0 0.0
    %546 = vmatpush2.msra.mxu0 0.0
    %547 = vmatprep.subr.mxu0 0.0
    %548 = vmatpush2.msra.mxu0 0.0
    %549 = vmatprep.subr.mxu0 0.0
    %550 = vmatpush2.msra.mxu0 0.0
    %551 = vmatprep.subr.mxu0 0.0
    %552 = vmatpush2.msra.mxu0 0.0
    %553 = vmatprep.subr.mxu0 0.0
    %554 = vmatpush2.msra.mxu0 0.0
    %555 = vmatprep.mubr.f32.mxu0 0.0
    %556 = vmatmul.mubr.f32.gmra.mxu0 %v489
    %v557 = vpop.f32.mrf.mxu0
    %v558 = vadd.f32 0.0, %v557
    %v559 = vpop.f32.mrf.mxu0
    %560 = vdwg.mxu0
    %v561 = vadd.f32 %v485, %v558
    %v562 = vmul.f32 %v561, 0.5
    %v563 = vtanh.pop %v562
    %v564 = vmul.f32 %v563, 0.5
    %v565 = vadd.f32 %v564, 0.5
    %v566 = vtanh.pop %v561
    %v567 = vmul.f32 %v565, %v477
    %569 = vrot.lane.b32.xlu0 %v566, 64
    %v570 = vpop.permute.xlu0 %569
    %v572 = vmul.f32 %v565, %v570
    %574 = vrot.lane.b32.xlu0 %v572, 32
    %v575 = vpop.permute.xlu0 %574
    %v577 = vadd.f32 %v567, %v575
    %v578 = vtanh.pop %v577
    %580 = vrot.lane.b32.xlu0 %v578, 64
    %v581 = vpop.permute.xlu0 %580
    %v583 = vmul.f32 %v565, %v581
    %s584 = scalar_lea.vmem [#allocation2], 32
    %v585 = vld [vmem:[%s584] sm:$0xff]
    %587 = vrot.lane.b32.xlu0 %v583, 32
    %v588 = vpop.permute.xlu0 %587
    %v589 = vsel %vm187, %v588, 0
    %591 = vmatprep.subr.mxu0 0.0
    %592 = vmatpush1.msra.mxu0 0.0
    %593 = vmatprep.subr.mxu0 0.0
    %594 = vmatpush1.msra.mxu0 0.0
    %595 = vmatprep.subr.mxu0 0.0
    %596 = vmatpush1.msra.mxu0 0.0
    %597 = vmatprep.subr.mxu0 0.0
    %598 = vmatpush1.msra.mxu0 0.0
    %599 = vmatprep.subr.mxu0 0.0
    %600 = vmatpush1.msra.mxu0 0.0
    %601 = vmatprep.subr.mxu0 0.0
    %602 = vmatpush1.msra.mxu0 0.0
    %603 = vmatprep.subr.mxu0 0.0
    %604 = vmatpush1.msra.mxu0 0.0
    %605 = vmatprep.subr.mxu0 0.0
    %606 = vmatpush1.msra.mxu0 0.0
    %607 = vmatprep.subr.mxu0 0.0
    %608 = vmatpush1.msra.mxu0 0.0
    %609 = vmatprep.subr.mxu0 0.0
    %610 = vmatpush1.msra.mxu0 0.0
    %611 = vmatprep.subr.mxu0 0.0
    %612 = vmatpush1.msra.mxu0 0.0
    %613 = vmatprep.subr.mxu0 0.0
    %614 = vmatpush1.msra.mxu0 0.0
    %615 = vmatprep.subr.mxu0 0.0
    %616 = vmatpush1.msra.mxu0 %v185
    %617 = vmatprep.subr.mxu0 0.0
    %618 = vmatpush1.msra.mxu0 %v184
    %619 = vmatprep.subr.mxu0 0.0
    %620 = vmatpush1.msra.mxu0 %v183
    %621 = vmatprep.subr.mxu0 0.0
    %622 = vmatpush1.msra.mxu0 %v182
    %623 = vmatprep.subr.mxu0 0.0
    %624 = vmatpush2.msra.mxu0 0.0
    %625 = vmatprep.subr.mxu0 0.0
    %626 = vmatpush2.msra.mxu0 0.0
    %627 = vmatprep.subr.mxu0 0.0
    %628 = vmatpush2.msra.mxu0 0.0
    %629 = vmatprep.subr.mxu0 0.0
    %630 = vmatpush2.msra.mxu0 0.0
    %631 = vmatprep.subr.mxu0 0.0
    %632 = vmatpush2.msra.mxu0 0.0
    %633 = vmatprep.subr.mxu0 0.0
    %634 = vmatpush2.msra.mxu0 0.0
    %635 = vmatprep.subr.mxu0 0.0
    %636 = vmatpush2.msra.mxu0 0.0
    %637 = vmatprep.subr.mxu0 0.0
    %638 = vmatpush2.msra.mxu0 0.0
    %639 = vmatprep.subr.mxu0 0.0
    %640 = vmatpush2.msra.mxu0 0.0
    %641 = vmatprep.subr.mxu0 0.0
    %642 = vmatpush2.msra.mxu0 0.0
    %643 = vmatprep.subr.mxu0 0.0
    %644 = vmatpush2.msra.mxu0 0.0
    %645 = vmatprep.subr.mxu0 0.0
    %646 = vmatpush2.msra.mxu0 0.0
    %647 = vmatprep.subr.mxu0 0.0
    %648 = vmatpush2.msra.mxu0 0.0
    %649 = vmatprep.subr.mxu0 0.0
    %650 = vmatpush2.msra.mxu0 0.0
    %651 = vmatprep.subr.mxu0 0.0
    %652 = vmatpush2.msra.mxu0 0.0
    %653 = vmatprep.subr.mxu0 0.0
    %654 = vmatpush2.msra.mxu0 0.0
    %655 = vmatprep.mubr.f32.mxu0 0.0
    %656 = vmatmul.mubr.f32.gmra.mxu0 %v589
    %v657 = vpop.f32.mrf.mxu0
    %v658 = vadd.f32 0.0, %v657
    %v659 = vpop.f32.mrf.mxu0
    %660 = vdwg.mxu0
    %v661 = vadd.f32 %v585, %v658
    %v662 = vmul.f32 %v661, 0.5
    %v663 = vtanh.pop %v662
    %v664 = vmul.f32 %v663, 0.5
    %v665 = vadd.f32 %v664, 0.5
    %v666 = vtanh.pop %v661
    %v667 = vmul.f32 %v665, %v577
    %669 = vrot.lane.b32.xlu0 %v666, 64
    %v670 = vpop.permute.xlu0 %669
    %v672 = vmul.f32 %v665, %v670
    %674 = vrot.lane.b32.xlu0 %v672, 32
    %v675 = vpop.permute.xlu0 %674
    %v677 = vadd.f32 %v667, %v675
    %v678 = vtanh.pop %v677
    %680 = vrot.lane.b32.xlu0 %v678, 64
    %v681 = vpop.permute.xlu0 %680
    %v683 = vmul.f32 %v665, %v681
    %s684 = scalar_lea.vmem [#allocation2], 40
    %v685 = vld [vmem:[%s684] sm:$0xff]
    %687 = vrot.lane.b32.xlu0 %v683, 32
    %v688 = vpop.permute.xlu0 %687
    %v689 = vsel %vm187, %v688, 0
    %691 = vmatprep.subr.mxu0 0.0
    %692 = vmatpush1.msra.mxu0 0.0
    %693 = vmatprep.subr.mxu0 0.0
    %694 = vmatpush1.msra.mxu0 0.0
    %695 = vmatprep.subr.mxu0 0.0
    %696 = vmatpush1.msra.mxu0 0.0
    %697 = vmatprep.subr.mxu0 0.0
    %698 = vmatpush1.msra.mxu0 0.0
    %699 = vmatprep.subr.mxu0 0.0
    %700 = vmatpush1.msra.mxu0 0.0
    %701 = vmatprep.subr.mxu0 0.0
    %702 = vmatpush1.msra.mxu0 0.0
    %703 = vmatprep.subr.mxu0 0.0
    %704 = vmatpush1.msra.mxu0 0.0
    %705 = vmatprep.subr.mxu0 0.0
    %706 = vmatpush1.msra.mxu0 0.0
    %707 = vmatprep.subr.mxu0 0.0
    %708 = vmatpush1.msra.mxu0 0.0
    %709 = vmatprep.subr.mxu0 0.0
    %710 = vmatpush1.msra.mxu0 0.0
    %711 = vmatprep.subr.mxu0 0.0
    %712 = vmatpush1.msra.mxu0 0.0
    %713 = vmatprep.subr.mxu0 0.0
    %714 = vmatpush1.msra.mxu0 0.0
    %715 = vmatprep.subr.mxu0 0.0
    %716 = vmatpush1.msra.mxu0 %v185
    %717 = vmatprep.subr.mxu0 0.0
    %718 = vmatpush1.msra.mxu0 %v184
    %719 = vmatprep.subr.mxu0 0.0
    %720 = vmatpush1.msra.mxu0 %v183
    %721 = vmatprep.subr.mxu0 0.0
    %722 = vmatpush1.msra.mxu0 %v182
    %723 = vmatprep.subr.mxu0 0.0
    %724 = vmatpush2.msra.mxu0 0.0
    %725 = vmatprep.subr.mxu0 0.0
    %726 = vmatpush2.msra.mxu0 0.0
    %727 = vmatprep.subr.mxu0 0.0
    %728 = vmatpush2.msra.mxu0 0.0
    %729 = vmatprep.subr.mxu0 0.0
    %730 = vmatpush2.msra.mxu0 0.0
    %731 = vmatprep.subr.mxu0 0.0
    %732 = vmatpush2.msra.mxu0 0.0
    %733 = vmatprep.subr.mxu0 0.0
    %734 = vmatpush2.msra.mxu0 0.0
    %735 = vmatprep.subr.mxu0 0.0
    %736 = vmatpush2.msra.mxu0 0.0
    %737 = vmatprep.subr.mxu0 0.0
    %738 = vmatpush2.msra.mxu0 0.0
    %739 = vmatprep.subr.mxu0 0.0
    %740 = vmatpush2.msra.mxu0 0.0
    %741 = vmatprep.subr.mxu0 0.0
    %742 = vmatpush2.msra.mxu0 0.0
    %743 = vmatprep.subr.mxu0 0.0
    %744 = vmatpush2.msra.mxu0 0.0
    %745 = vmatprep.subr.mxu0 0.0
    %746 = vmatpush2.msra.mxu0 0.0
    %747 = vmatprep.subr.mxu0 0.0
    %748 = vmatpush2.msra.mxu0 0.0
    %749 = vmatprep.subr.mxu0 0.0
    %750 = vmatpush2.msra.mxu0 0.0
    %751 = vmatprep.subr.mxu0 0.0
    %752 = vmatpush2.msra.mxu0 0.0
    %753 = vmatprep.subr.mxu0 0.0
    %754 = vmatpush2.msra.mxu0 0.0
    %755 = vmatprep.mubr.f32.mxu0 0.0
    %756 = vmatmul.mubr.f32.gmra.mxu0 %v689
    %v757 = vpop.f32.mrf.mxu0
    %v758 = vadd.f32 0.0, %v757
    %v759 = vpop.f32.mrf.mxu0
    %760 = vdwg.mxu0
    %v761 = vadd.f32 %v685, %v758
    %v762 = vmul.f32 %v761, 0.5
    %v763 = vtanh.pop %v762
    %v764 = vmul.f32 %v763, 0.5
    %v765 = vadd.f32 %v764, 0.5
    %v766 = vtanh.pop %v761
    %v767 = vmul.f32 %v765, %v677
    %769 = vrot.lane.b32.xlu0 %v766, 64
    %v770 = vpop.permute.xlu0 %769
    %v772 = vmul.f32 %v765, %v770
    %774 = vrot.lane.b32.xlu0 %v772, 32
    %v775 = vpop.permute.xlu0 %774
    %v777 = vadd.f32 %v767, %v775
    %v778 = vtanh.pop %v777
    %780 = vrot.lane.b32.xlu0 %v778, 64
    %v781 = vpop.permute.xlu0 %780
    %v783 = vmul.f32 %v765, %v781
    %s784 = scalar_lea.vmem [#allocation2], 48
    %v785 = vld [vmem:[%s784] sm:$0xff]
    %787 = vrot.lane.b32.xlu0 %v783, 32
    %v788 = vpop.permute.xlu0 %787
    %v789 = vsel %vm187, %v788, 0
    %791 = vmatprep.subr.mxu0 0.0
    %792 = vmatpush1.msra.mxu0 0.0
    %793 = vmatprep.subr.mxu0 0.0
    %794 = vmatpush1.msra.mxu0 0.0
    %795 = vmatprep.subr.mxu0 0.0
    %796 = vmatpush1.msra.mxu0 0.0
    %797 = vmatprep.subr.mxu0 0.0
    %798 = vmatpush1.msra.mxu0 0.0
    %799 = vmatprep.subr.mxu0 0.0
    %800 = vmatpush1.msra.mxu0 0.0
    %801 = vmatprep.subr.mxu0 0.0
    %802 = vmatpush1.msra.mxu0 0.0
    %803 = vmatprep.subr.mxu0 0.0
    %804 = vmatpush1.msra.mxu0 0.0
    %805 = vmatprep.subr.mxu0 0.0
    %806 = vmatpush1.msra.mxu0 0.0
    %807 = vmatprep.subr.mxu0 0.0
    %808 = vmatpush1.msra.mxu0 0.0
    %809 = vmatprep.subr.mxu0 0.0
    %810 = vmatpush1.msra.mxu0 0.0
    %811 = vmatprep.subr.mxu0 0.0
    %812 = vmatpush1.msra.mxu0 0.0
    %813 = vmatprep.subr.mxu0 0.0
    %814 = vmatpush1.msra.mxu0 0.0
    %815 = vmatprep.subr.mxu0 0.0
    %816 = vmatpush1.msra.mxu0 %v185
    %817 = vmatprep.subr.mxu0 0.0
    %818 = vmatpush1.msra.mxu0 %v184
    %819 = vmatprep.subr.mxu0 0.0
    %820 = vmatpush1.msra.mxu0 %v183
    %821 = vmatprep.subr.mxu0 0.0
    %822 = vmatpush1.msra.mxu0 %v182
    %823 = vmatprep.subr.mxu0 0.0
    %824 = vmatpush2.msra.mxu0 0.0
    %825 = vmatprep.subr.mxu0 0.0
    %826 = vmatpush2.msra.mxu0 0.0
    %827 = vmatprep.subr.mxu0 0.0
    %828 = vmatpush2.msra.mxu0 0.0
    %829 = vmatprep.subr.mxu0 0.0
    %830 = vmatpush2.msra.mxu0 0.0
    %831 = vmatprep.subr.mxu0 0.0
    %832 = vmatpush2.msra.mxu0 0.0
    %833 = vmatprep.subr.mxu0 0.0
    %834 = vmatpush2.msra.mxu0 0.0
    %835 = vmatprep.subr.mxu0 0.0
    %836 = vmatpush2.msra.mxu0 0.0
    %837 = vmatprep.subr.mxu0 0.0
    %838 = vmatpush2.msra.mxu0 0.0
    %839 = vmatprep.subr.mxu0 0.0
    %840 = vmatpush2.msra.mxu0 0.0
    %841 = vmatprep.subr.mxu0 0.0
    %842 = vmatpush2.msra.mxu0 0.0
    %843 = vmatprep.subr.mxu0 0.0
    %844 = vmatpush2.msra.mxu0 0.0
    %845 = vmatprep.subr.mxu0 0.0
    %846 = vmatpush2.msra.mxu0 0.0
    %847 = vmatprep.subr.mxu0 0.0
    %848 = vmatpush2.msra.mxu0 0.0
    %849 = vmatprep.subr.mxu0 0.0
    %850 = vmatpush2.msra.mxu0 0.0
    %851 = vmatprep.subr.mxu0 0.0
    %852 = vmatpush2.msra.mxu0 0.0
    %853 = vmatprep.subr.mxu0 0.0
    %854 = vmatpush2.msra.mxu0 0.0
    %855 = vmatprep.mubr.f32.mxu0 0.0
    %856 = vmatmul.mubr.f32.gmra.mxu0 %v789
    %v857 = vpop.f32.mrf.mxu0
    %v858 = vadd.f32 0.0, %v857
    %v859 = vpop.f32.mrf.mxu0
    %860 = vdwg.mxu0
    %v861 = vadd.f32 %v785, %v858
    %v862 = vmul.f32 %v861, 0.5
    %v863 = vtanh.pop %v862
    %v864 = vmul.f32 %v863, 0.5
    %v865 = vadd.f32 %v864, 0.5
    %v866 = vtanh.pop %v861
    %v867 = vmul.f32 %v865, %v777
    %869 = vrot.lane.b32.xlu0 %v866, 64
    %v870 = vpop.permute.xlu0 %869
    %v872 = vmul.f32 %v865, %v870
    %874 = vrot.lane.b32.xlu0 %v872, 32
    %v875 = vpop.permute.xlu0 %874
    %v877 = vadd.f32 %v867, %v875
    %v878 = vtanh.pop %v877
    %880 = vrot.lane.b32.xlu0 %v878, 64
    %v881 = vpop.permute.xlu0 %880
    %v883 = vmul.f32 %v865, %v881
    %s884 = scalar_lea.vmem [#allocation2], 56
    %v885 = vld [vmem:[%s884] sm:$0xff]
    %887 = vrot.lane.b32.xlu0 %v883, 32
    %v888 = vpop.permute.xlu0 %887
    %v889 = vsel %vm187, %v888, 0
    %891 = vmatprep.subr.mxu0 0.0
    %892 = vmatpush1.msra.mxu0 0.0
    %893 = vmatprep.subr.mxu0 0.0
    %894 = vmatpush1.msra.mxu0 0.0
    %895 = vmatprep.subr.mxu0 0.0
    %896 = vmatpush1.msra.mxu0 0.0
    %897 = vmatprep.subr.mxu0 0.0
    %898 = vmatpush1.msra.mxu0 0.0
    %899 = vmatprep.subr.mxu0 0.0
    %900 = vmatpush1.msra.mxu0 0.0
    %901 = vmatprep.subr.mxu0 0.0
    %902 = vmatpush1.msra.mxu0 0.0
    %903 = vmatprep.subr.mxu0 0.0
    %904 = vmatpush1.msra.mxu0 0.0
    %905 = vmatprep.subr.mxu0 0.0
    %906 = vmatpush1.msra.mxu0 0.0
    %907 = vmatprep.subr.mxu0 0.0
    %908 = vmatpush1.msra.mxu0 0.0
    %909 = vmatprep.subr.mxu0 0.0
    %910 = vmatpush1.msra.mxu0 0.0
    %911 = vmatprep.subr.mxu0 0.0
    %912 = vmatpush1.msra.mxu0 0.0
    %913 = vmatprep.subr.mxu0 0.0
    %914 = vmatpush1.msra.mxu0 0.0
    %915 = vmatprep.subr.mxu0 0.0
    %916 = vmatpush1.msra.mxu0 %v185
    %917 = vmatprep.subr.mxu0 0.0
    %918 = vmatpush1.msra.mxu0 %v184
    %919 = vmatprep.subr.mxu0 0.0
    %920 = vmatpush1.msra.mxu0 %v183
    %921 = vmatprep.subr.mxu0 0.0
    %922 = vmatpush1.msra.mxu0 %v182
    %923 = vmatprep.subr.mxu0 0.0
    %924 = vmatpush2.msra.mxu0 0.0
    %925 = vmatprep.subr.mxu0 0.0
    %926 = vmatpush2.msra.mxu0 0.0
    %927 = vmatprep.subr.mxu0 0.0
    %928 = vmatpush2.msra.mxu0 0.0
    %929 = vmatprep.subr.mxu0 0.0
    %930 = vmatpush2.msra.mxu0 0.0
    %931 = vmatprep.subr.mxu0 0.0
    %932 = vmatpush2.msra.mxu0 0.0
    %933 = vmatprep.subr.mxu0 0.0
    %934 = vmatpush2.msra.mxu0 0.0
    %935 = vmatprep.subr.mxu0 0.0
    %936 = vmatpush2.msra.mxu0 0.0
    %937 = vmatprep.subr.mxu0 0.0
    %938 = vmatpush2.msra.mxu0 0.0
    %939 = vmatprep.subr.mxu0 0.0
    %940 = vmatpush2.msra.mxu0 0.0
    %941 = vmatprep.subr.mxu0 0.0
    %942 = vmatpush2.msra.mxu0 0.0
    %943 = vmatprep.subr.mxu0 0.0
    %944 = vmatpush2.msra.mxu0 0.0
    %945 = vmatprep.subr.mxu0 0.0
    %946 = vmatpush2.msra.mxu0 0.0
    %947 = vmatprep.subr.mxu0 0.0
    %948 = vmatpush2.msra.mxu0 0.0
    %949 = vmatprep.subr.mxu0 0.0
    %950 = vmatpush2.msra.mxu0 0.0
    %951 = vmatprep.subr.mxu0 0.0
    %952 = vmatpush2.msra.mxu0 0.0
    %953 = vmatprep.subr.mxu0 0.0
    %954 = vmatpush2.msra.mxu0 0.0
    %955 = vmatprep.mubr.f32.mxu0 0.0
    %956 = vmatmul.mubr.f32.gmra.mxu0 %v889
    %v957 = vpop.f32.mrf.mxu0
    %v958 = vadd.f32 0.0, %v957
    %v959 = vpop.f32.mrf.mxu0
    %960 = vdwg.mxu0
    %v961 = vadd.f32 %v885, %v958
    %v962 = vmul.f32 %v961, 0.5
    %v963 = vtanh.pop %v962
    %v964 = vmul.f32 %v963, 0.5
    %v965 = vadd.f32 %v964, 0.5
    %v966 = vtanh.pop %v961
    %v967 = vmul.f32 %v965, %v877
    %969 = vrot.lane.b32.xlu0 %v966, 64
    %v970 = vpop.permute.xlu0 %969
    %v972 = vmul.f32 %v965, %v970
    %974 = vrot.lane.b32.xlu0 %v972, 32
    %v975 = vpop.permute.xlu0 %974
    %v977 = vadd.f32 %v967, %v975
    %v978 = vtanh.pop %v977
    %980 = vrot.lane.b32.xlu0 %v978, 64
    %v981 = vpop.permute.xlu0 %980
    %v983 = vmul.f32 %v965, %v981
    %v984 = vld [vmem:[%s4] sm:$0xff]
    %v985 = vld [vmem:[%s4 + $0x8] sm:$0xff]
    %v986 = vld [vmem:[%s4 + $0x10] sm:$0xff]
    %v987 = vld [vmem:[%s4 + $0x18] sm:$0xff]
    %v988 = vld [vmem:[%s5] sm:$0x1]
    %v990 = vlaneseq
    %v991 = vshrl.u32 %v990, 7
    %v992 = vsub.s32 0, %v991
    %v993 = vrot.slane %v988, %v992
    %996 = vrot.lane.b32.xlu0 %v983, 32
    %v997 = vpop.permute.xlu0 %996
    %v998 = vsel %vm187, %v997, 0
    %1000 = vmatprep.subr.mxu0 0.0
    %1001 = vmatpush1.msra.mxu0 0.0
    %1002 = vmatprep.subr.mxu0 0.0
    %1003 = vmatpush1.msra.mxu0 0.0
    %1004 = vmatprep.subr.mxu0 0.0
    %1005 = vmatpush1.msra.mxu0 0.0
    %1006 = vmatprep.subr.mxu0 0.0
    %1007 = vmatpush1.msra.mxu0 0.0
    %1008 = vmatprep.subr.mxu0 0.0
    %1009 = vmatpush1.msra.mxu0 0.0
    %1010 = vmatprep.subr.mxu0 0.0
    %1011 = vmatpush1.msra.mxu0 0.0
    %1012 = vmatprep.subr.mxu0 0.0
    %1013 = vmatpush1.msra.mxu0 0.0
    %1014 = vmatprep.subr.mxu0 0.0
    %1015 = vmatpush1.msra.mxu0 0.0
    %1016 = vmatprep.subr.mxu0 0.0
    %1017 = vmatpush1.msra.mxu0 0.0
    %1018 = vmatprep.subr.mxu0 0.0
    %1019 = vmatpush1.msra.mxu0 0.0
    %1020 = vmatprep.subr.mxu0 0.0
    %1021 = vmatpush1.msra.mxu0 0.0
    %1022 = vmatprep.subr.mxu0 0.0
    %1023 = vmatpush1.msra.mxu0 0.0
    %1024 = vmatprep.subr.mxu0 0.0
    %1025 = vmatpush1.msra.mxu0 %v987
    %1026 = vmatprep.subr.mxu0 0.0
    %1027 = vmatpush1.msra.mxu0 %v986
    %1028 = vmatprep.subr.mxu0 0.0
    %1029 = vmatpush1.msra.mxu0 %v985
    %1030 = vmatprep.subr.mxu0 0.0
    %1031 = vmatpush1.msra.mxu0 %v984
    %1032 = vmatprep.subr.mxu0 0.0
    %1033 = vmatpush2.msra.mxu0 0.0
    %1034 = vmatprep.subr.mxu0 0.0
    %1035 = vmatpush2.msra.mxu0 0.0
    %1036 = vmatprep.subr.mxu0 0.0
    %1037 = vmatpush2.msra.mxu0 0.0
    %1038 = vmatprep.subr.mxu0 0.0
    %1039 = vmatpush2.msra.mxu0 0.0
    %1040 = vmatprep.subr.mxu0 0.0
    %1041 = vmatpush2.msra.mxu0 0.0
    %1042 = vmatprep.subr.mxu0 0.0
    %1043 = vmatpush2.msra.mxu0 0.0
    %1044 = vmatprep.subr.mxu0 0.0
    %1045 = vmatpush2.msra.mxu0 0.0
    %1046 = vmatprep.subr.mxu0 0.0
    %1047 = vmatpush2.msra.mxu0 0.0
    %1048 = vmatprep.subr.mxu0 0.0
    %1049 = vmatpush2.msra.mxu0 0.0
    %1050 = vmatprep.subr.mxu0 0.0
    %1051 = vmatpush2.msra.mxu0 0.0
    %1052 = vmatprep.subr.mxu0 0.0
    %1053 = vmatpush2.msra.mxu0 0.0
    %1054 = vmatprep.subr.mxu0 0.0
    %1055 = vmatpush2.msra.mxu0 0.0
    %1056 = vmatprep.subr.mxu0 0.0
    %1057 = vmatpush2.msra.mxu0 0.0
    %1058 = vmatprep.subr.mxu0 0.0
    %1059 = vmatpush2.msra.mxu0 0.0
    %1060 = vmatprep.subr.mxu0 0.0
    %1061 = vmatpush2.msra.mxu0 0.0
    %1062 = vmatprep.subr.mxu0 0.0
    %1063 = vmatpush2.msra.mxu0 0.0
    %1064 = vmatprep.mubr.f32.mxu0 0.0
    %1065 = vmatmul.mubr.f32.gmra.mxu0 %v998
    %v1066 = vpop.f32.mrf.mxu0
    %v1067 = vadd.f32 %v993, %v1066
    %v1068 = vpop.f32.mrf.mxu0
    %1069 = vdwg.mxu0
    %1070 = vst [vmem:[#allocation3] sm:$0xff] %v1067
    // Predicated region
    $region26: #{tpu_custom_call.1} parent=1 // pred_check
      _
    $region27: #{tpu_custom_call.1} parent=1 // pred_check_branch
      %1072 = sbr.rel (0) target = $region29
    $region28: #{tpu_custom_call.1} parent=1 // pred_region
      %s1074 = ssub.s32 128, 128
      %1075 = vsyncadd [#allocation4], %s1074
      %s1077 = sshll.u32 [#allocation3], 4
      %s1078 = int_to_ptr.vmem [resolvable:$true] %s1077
      %1080 = dma.vmem_to_hbm [thread:$0]  %s1078, 128, %s6, [#allocation4]
    $region29: #{tpu_custom_call.1} parent=1 // pred_fallthru
      _
    // Predicated region
    $region30: #{tpu_custom_call.1} parent=1 // pred_check
      _
    $region31: #{tpu_custom_call.1} parent=1 // pred_check_branch
      %1082 = sbr.rel (0) target = $region33
    $region32: #{tpu_custom_call.1} parent=1 // pred_region
      %1083 = dma.done [#allocation4], 128
    $region33: #{tpu_custom_call.1} parent=1 // pred_fallthru
      _
    %1084 = vsyncpa [#allocation4], 1

</llo_original>
